<compile_context>
chip_gen: v6e
topology: v6e:2x2x1
jax: 0.10.0
libtpu: 0.0.40
codegen_flags: <defaults>
</compile_context>

<pallas_src>
import functools

import jax
import jax.numpy as jnp
from jax.experimental import pallas as pl
from jax.experimental.pallas import tpu as pltpu

PAD = 0
LN_EPS = 1e-5
NEG_INF = -1e30                       # numerically identical to -inf after softmax
COMPUTE_DTYPE = jnp.bfloat16          # MXU matmul dtype; LN / softmax stay fp32
VMEM_LIMIT = 64 * 1024 * 1024         # safe on v5e/v6e (128 MiB) and v7x (64 MiB)


def _layer_norm(x, g, b):
    mu = jnp.mean(x, axis=-1, keepdims=True)
    var = jnp.mean(jnp.square(x - mu), axis=-1, keepdims=True)
    return (x - mu) * jax.lax.rsqrt(var + LN_EPS) * g + b


# ----------------------------------------------------------------------------
# Pallas kernels
# ----------------------------------------------------------------------------
def fused_layers_kernel(x_ref,
                        wqkv_ref, bqkv_ref, wo_ref, bo_ref,
                        ln1_g_ref, ln1_b_ref,
                        w1_ref, b1_ref, w2_ref, b2_ref,
                        ln2_g_ref, ln2_b_ref,
                        fln_g_ref, fln_b_ref,
                        out_ref, h_ref, *, n_heads, compute_dtype):
    """All transformer layers for one batch element; grid=(B, n_layers).

    The (T, D) activation stays in the VMEM scratch `h_ref` across the layer
    axis; per-layer weights stream in along the 'arbitrary' layer axis.
    """
    layer = pl.program_id(1)

    @pl.when(layer == 0)
    def _():
        h_ref[...] = x_ref[0]                          # load embeddings once per b

    x = h_ref[...]                                     # (T, D) fp32, VMEM resident
    T, D = x.shape
    H = n_heads
    dh = D // H
    scale = 1.0 / (dh ** 0.5)
    xc = x.astype(compute_dtype)

    # ---- QKV projection: weights pre-transposed to (D, 3D) -> no in-kernel .T ----
    qkv = jnp.dot(xc, wqkv_ref[0],
                  preferred_element_type=jnp.float32) + bqkv_ref[0]       # (T, 3D)
    q = qkv[:, 0 * D:1 * D]
    k = qkv[:, 1 * D:2 * D]
    v = qkv[:, 2 * D:3 * D]

    # head-major stacking (H, T, dh): batched MXU matmuls instead of a per-head loop
    qh = jnp.stack([q[:, h * dh:(h + 1) * dh] for h in range(H)], axis=0)
    kh = jnp.stack([k[:, h * dh:(h + 1) * dh] for h in range(H)], axis=0)
    vh = jnp.stack([v[:, h * dh:(h + 1) * dh] for h in range(H)], axis=0)
    qh = qh.astype(compute_dtype)
    kh = kh.astype(compute_dtype)
    vh = vh.astype(compute_dtype)

    # ---- scores + causal mask generated in-kernel (no (T,T) HBM input) ----
    s = jnp.einsum("hqd,hkd->hqk", qh, kh,
                   preferred_element_type=jnp.float32) * scale           # (H, T, T)
    row = jax.lax.broadcasted_iota(jnp.int32, (T, T), 0)
    col = jax.lax.broadcasted_iota(jnp.int32, (T, T), 1)
    s = jnp.where((col <= row)[None, :, :], s, NEG_INF)

    # softmax (f32); divide moved to the EUP via approximate reciprocal
    s = s - jnp.max(s, axis=-1, keepdims=True)
    p = jnp.exp(s)
    p = p * pl.reciprocal(jnp.sum(p, axis=-1, keepdims=True), approx=True)

    ctx = jnp.einsum("hqk,hkd->hqd", p.astype(compute_dtype), vh,
                     preferred_element_type=jnp.float32)                 # (H, T, dh)

    # ---- output projection with head merge folded in (no lane concatenate) ----
    proj = jnp.einsum("hqd,hdo->hqo", ctx.astype(compute_dtype), wo_ref[0],
                      preferred_element_type=jnp.float32)                # (H, T, D)
    attn = jnp.sum(proj, axis=0) + bo_ref[0]                             # (T, D)

    # ---- residual + LayerNorm1 (post-norm) ----
    h1 = _layer_norm(x + attn, ln1_g_ref[0], ln1_b_ref[0])

    # ---- feed-forward (ReLU), weights pre-transposed ----
    ff = jnp.dot(h1.astype(compute_dtype), w1_ref[0],
                 preferred_element_type=jnp.float32) + b1_ref[0]
    ff = jnp.maximum(ff, 0.0)
    ff = jnp.dot(ff.astype(compute_dtype), w2_ref[0],
                 preferred_element_type=jnp.float32) + b2_ref[0]

    # ---- residual + LayerNorm2 ----
    h2 = _layer_norm(h1 + ff, ln2_g_ref[0], ln2_b_ref[0])
    h_ref[...] = h2

    # last layer: apply the model's final LayerNorm and emit to HBM once
    @pl.when(layer == pl.num_programs(1) - 1)
    def _():
        out_ref[0] = _layer_norm(h2, fln_g_ref[...], fln_b_ref[...]).astype(out_ref.dtype)


def lm_head_kernel(h_ref, w_ref, b_ref, out_ref, *, compute_dtype):
    """Output projection (d_model -> vocab tile); input is already final-normed."""
    x = h_ref[0].astype(compute_dtype)                                   # (T, D)
    logits = jnp.dot(x, w_ref[...], preferred_element_type=jnp.float32) + b_ref[...]
    out_ref[0] = logits.astype(out_ref.dtype)


# ----------------------------------------------------------------------------
# Wrappers
# ----------------------------------------------------------------------------
def run_fused_layers(x, stacked, final_g, final_b, n_heads,
                     compute_dtype=COMPUTE_DTYPE):
    B, T, D = x.shape
    L = stacked["wqkv_t"].shape[0]
    d_ff = stacked["w1_t"].shape[2]

    ins = (x,
           stacked["wqkv_t"], stacked["bqkv"], stacked["wo_h"], stacked["bo"],
           stacked["ln1_g"], stacked["ln1_b"],
           stacked["w1_t"], stacked["b1"], stacked["w2_t"], stacked["b2"],
           stacked["ln2_g"], stacked["ln2_b"],
           final_g, final_b)

    def per_batch(shape):
        return pl.BlockSpec(shape, lambda b, l: (b,) + (0,) * (len(shape) - 1))

    def per_layer(shape):
        return pl.BlockSpec((1,) + tuple(shape[1:]),
                            lambda b, l: (l,) + (0,) * (len(shape) - 1))

    def shared(shape):
        return pl.BlockSpec(shape, lambda b, l: (0,) * len(shape))

    in_specs = ([per_batch((1, T, D))]
                + [per_layer(a.shape) for a in ins[1:13]]
                + [shared(final_g.shape), shared(final_b.shape)])

    weight_bytes = sum(int(a.size) * a.dtype.itemsize for a in ins[1:])
    flops_layer = (2 * T * D * 3 * D      # qkv projection
                   + 4 * T * T * D        # scores + PV (all heads)
                   + 2 * T * D * D        # output projection
                   + 4 * T * D * d_ff)    # FFN
    cost = pl.CostEstimate(
        flops=int(B * L * flops_layer),
        transcendentals=int(B * L * (n_heads * T * T + 4 * T)),
        bytes_accessed=int(B * weight_bytes + 2 * B * T * D * 4),
    )

    return pl.pallas_call(
        functools.partial(fused_layers_kernel, n_heads=n_heads,
                          compute_dtype=compute_dtype),
        out_shape=jax.ShapeDtypeStruct((B, T, D), jnp.float32),
        grid=(B, L),
        in_specs=in_specs,
        out_specs=pl.BlockSpec((1, T, D), lambda b, l: (b, 0, 0)),
        scratch_shapes=[pltpu.VMEM((T, D), jnp.float32)],
        compiler_params=pltpu.CompilerParams(
            dimension_semantics=("parallel", "arbitrary"),
            vmem_limit_bytes=VMEM_LIMIT),
        cost_estimate=cost,
    )(*ins)


def run_lm_head(hn, w_out_t, b_out, tv=512, compute_dtype=COMPUTE_DTYPE):
    B, T, D = hn.shape
    V = w_out_t.shape[1]
    tv = V if V <= tv else tv
    if tv != V:
        assert tv % 128 == 0, "vocab tile must be lane-aligned"
    nv = pl.cdiv(V, tv)

    cost = pl.CostEstimate(
        flops=int(2 * B * T * D * V),
        transcendentals=0,
        bytes_accessed=int(B * T * D * 4 + B * D * V * w_out_t.dtype.itemsize
                           + B * T * V * 4),
    )

    return pl.pallas_call(
        functools.partial(lm_head_kernel, compute_dtype=compute_dtype),
        out_shape=jax.ShapeDtypeStruct((B, T, V), jnp.float32),
        grid=(B, nv),
        in_specs=[pl.BlockSpec((1, T, D), lambda b, j: (b, 0, 0)),
                  pl.BlockSpec((D, tv), lambda b, j: (0, j)),
                  pl.BlockSpec((1, tv), lambda b, j: (0, j))],
        out_specs=pl.BlockSpec((1, T, tv), lambda b, j: (b, 0, j)),
        compiler_params=pltpu.CompilerParams(
            dimension_semantics=("parallel", "parallel"),
            vmem_limit_bytes=VMEM_LIMIT),
        cost_estimate=cost,
    )(hn, w_out_t, b_out)


def prepare_params(params, n_heads, compute_dtype=COMPUTE_DTYPE):
    """Stack per-layer weights, pre-transpose to (in,out), cast matmul weights."""
    layers = params["layers"]
    L = len(layers)
    D = params["token_emb"].shape[1]
    H = n_heads
    dh = D // H

    def stack(key):
        return jnp.stack([lp[key] for lp in layers], axis=0)

    stacked = dict(
        wqkv_t=jnp.swapaxes(stack("wqkv"), 1, 2).astype(compute_dtype),   # (L, D, 3D)
        bqkv=stack("bqkv"),                                               # (L, 1, 3D)
        wo_h=jnp.swapaxes(stack("wo"), 1, 2)                              # (L, D, D)
                .reshape(L, H, dh, D).astype(compute_dtype),              # (L, H, dh, D)
        bo=stack("bo"),                                                   # (L, 1, D)
        ln1_g=stack("ln1_g"), ln1_b=stack("ln1_b"),                       # (L, 1, D)
        w1_t=jnp.swapaxes(stack("w1"), 1, 2).astype(compute_dtype),       # (L, D, 4D)
        b1=stack("b1"),                                                   # (L, 1, 4D)
        w2_t=jnp.swapaxes(stack("w2"), 1, 2).astype(compute_dtype),       # (L, 4D, D)
        b2=stack("b2"),                                                   # (L, 1, D)
        ln2_g=stack("ln2_g"), ln2_b=stack("ln2_b"),                       # (L, 1, D)
    )
    head = dict(
        w_out_t=params["out_w"].T.astype(compute_dtype),                  # (D, V)
        b_out=params["out_b"],                                            # (1, V)
    )
    return stacked, head


def decoder_only_transformer(x_ids, params, n_heads, compute_dtype=COMPUTE_DTYPE):
    """Full forward pass. Embedding gathers are plain-JAX glue; everything else
    (QKV/attention/FFN/LayerNorms/output head) runs inside Pallas kernels."""
    B, T = x_ids.shape
    h = params["token_emb"][x_ids] + params["pos_emb"][jnp.arange(T)][None, :, :]
    stacked, head = prepare_params(params, n_heads, compute_dtype)
    hn = run_fused_layers(h.astype(jnp.float32), stacked,
                          params["norm_g"], params["norm_b"],
                          n_heads, compute_dtype)
    return run_lm_head(hn, head["w_out_t"], head["b_out"],
                       compute_dtype=compute_dtype)


# ----------------------------------------------------------------------------
# Deterministic parameter construction (PyTorch (out_features, in_features) layout)
# ----------------------------------------------------------------------------
def init_params(key, vocab_size, d_model, n_heads, n_layers, max_pos=512):
    ks = iter(jax.random.split(key, 6 + 12 * n_layers))
    scale = 0.02

    def w(shape, s=scale):
        return (s * jax.random.normal(next(ks), shape)).astype(jnp.float32)

    token_emb = w((vocab_size, d_model))
    token_emb = token_emb.at[PAD].set(0.0)            # padding_idx=PAD
    pos_emb = w((max_pos, d_model))

    layers = []
    for _ in range(n_layers):
        d_ff = 4 * d_model
        layers.append(dict(
            wqkv=w((3 * d_model, d_model)), bqkv=w((1, 3 * d_model)),
            wo=w((d_model, d_model)),       bo=w((1, d_model)),
            ln1_g=1.0 + w((1, d_model)),    ln1_b=w((1, d_model)),
            w1=w((d_ff, d_model)),          b1=w((1, d_ff)),
            w2=w((d_model, d_ff)),          b2=w((1, d_model)),
            ln2_g=1.0 + w((1, d_model)),    ln2_b=w((1, d_model)),
        ))

    return dict(
        token_emb=token_emb, pos_emb=pos_emb, layers=layers,
        norm_g=1.0 + w((1, d_model)),
        norm_b=w((1, d_model)),
        out_w=w((vocab_size, d_model)),
        out_b=w((1, vocab_size)),
    )


# ----------------------------------------------------------------------------
# Pure-JAX fp32 reference (numerical sanity check)
# ----------------------------------------------------------------------------
def reference_forward(x_ids, params, n_heads):
    B, T = x_ids.shape
    D = params["token_emb"].shape[1]
    dh = D // n_heads
    h = params["token_emb"][x_ids] + params["pos_emb"][jnp.arange(T)][None]
    mask = jnp.where(jnp.arange(T)[None, :] > jnp.arange(T)[:, None], NEG_INF, 0.0)

    def ln(v, g, b):
        mu = v.mean(-1, keepdims=True)
        var = ((v - mu) ** 2).mean(-1, keepdims=True)
        return (v - mu) / jnp.sqrt(var + LN_EPS) * g[0] + b[0]

    for p in params["layers"]:
        qkv = h @ p["wqkv"].T + p["bqkv"][0]
        q, k, v = jnp.split(qkv, 3, axis=-1)
        q = q.reshape(B, T, n_heads, dh).transpose(0, 2, 1, 3)
        k = k.reshape(B, T, n_heads, dh).transpose(0, 2, 1, 3)
        v = v.reshape(B, T, n_heads, dh).transpose(0, 2, 1, 3)
        s = jnp.einsum("bhqd,bhkd->bhqk", q, k) / jnp.sqrt(dh) + mask
        a = jax.nn.softmax(s, axis=-1)
        o = jnp.einsum("bhqk,bhkd->bhqd", a, v).transpose(0, 2, 1, 3).reshape(B, T, D)
        o = o @ p["wo"].T + p["bo"][0]
        h = ln(h + o, p["ln1_g"], p["ln1_b"])
        f = jnp.maximum(h @ p["w1"].T + p["b1"][0], 0.0) @ p["w2"].T + p["b2"][0]
        h = ln(h + f, p["ln2_g"], p["ln2_b"])
    h = ln(h, params["norm_g"], params["norm_b"])
    return h @ params["out_w"].T + params["out_b"][0]


# ----------------------------------------------------------------------------
if __name__ == "__main__":
    VOCAB, D_MODEL, N_HEADS, N_LAYERS = 50, 32, 4, 2
    B, T = 2, 8

    key = jax.random.PRNGKey(0)
    pkey, xkey = jax.random.split(key)
    params = init_params(pkey, VOCAB, D_MODEL, N_HEADS, N_LAYERS)
    x_ids = jax.random.randint(xkey, (B, T), 0, VOCAB, dtype=jnp.int32)

    logits = decoder_only_transformer(x_ids, params, N_HEADS)
    logits = jax.block_until_ready(logits)

    ref = reference_forward(x_ids, params, N_HEADS)
    assert logits.shape == (B, T, VOCAB)
    # bf16 matmuls + approx reciprocal vs fp32 reference: loose-but-meaningful tol
    assert jnp.allclose(logits, ref, atol=2e-2, rtol=2e-2), \
        float(jnp.max(jnp.abs(logits - ref)))

    print("KERNEL_OK")
</pallas_src>

<mosaic_0001>
module attributes {stable_mosaic.version = 11 : i64} {
  func.func @fused_layers_kernel(%arg0: i32, %arg1: i32, %arg2: memref<1x8x32xf32, #tpu.memory_space<vmem>>, %arg3: memref<1x32x96xbf16, #tpu.memory_space<vmem>>, %arg4: memref<1x1x96xf32, #tpu.memory_space<vmem>>, %arg5: memref<1x4x8x32xbf16, #tpu.memory_space<vmem>>, %arg6: memref<1x1x32xf32, #tpu.memory_space<vmem>>, %arg7: memref<1x1x32xf32, #tpu.memory_space<vmem>>, %arg8: memref<1x1x32xf32, #tpu.memory_space<vmem>>, %arg9: memref<1x32x128xbf16, #tpu.memory_space<vmem>>, %arg10: memref<1x1x128xf32, #tpu.memory_space<vmem>>, %arg11: memref<1x128x32xbf16, #tpu.memory_space<vmem>>, %arg12: memref<1x1x32xf32, #tpu.memory_space<vmem>>, %arg13: memref<1x1x32xf32, #tpu.memory_space<vmem>>, %arg14: memref<1x1x32xf32, #tpu.memory_space<vmem>>, %arg15: memref<1x32xf32, #tpu.memory_space<vmem>>, %arg16: memref<1x32xf32, #tpu.memory_space<vmem>>, %arg17: memref<1x8x32xf32, #tpu.memory_space<vmem>>, %arg18: memref<8x32xf32, #tpu.memory_space<vmem>>) attributes {dimension_semantics = [#tpu.dimension_semantics<parallel>, #tpu.dimension_semantics<arbitrary>], iteration_bounds = array<i64: 2, 2>, scalar_prefetch = 0 : i64, scratch_operands = 1 : i64, tpu.core_type = #tpu.core_type<tc>, window_params = [{transform_indices = @transform_0, window_bounds = array<i64: 1, 8, 32>}, {transform_indices = @transform_1, window_bounds = array<i64: 1, 32, 96>}, {transform_indices = @transform_2, window_bounds = array<i64: 1, 1, 96>}, {transform_indices = @transform_3, window_bounds = array<i64: 1, 4, 8, 32>}, {transform_indices = @transform_4, window_bounds = array<i64: 1, 1, 32>}, {transform_indices = @transform_5, window_bounds = array<i64: 1, 1, 32>}, {transform_indices = @transform_6, window_bounds = array<i64: 1, 1, 32>}, {transform_indices = @transform_7, window_bounds = array<i64: 1, 32, 128>}, {transform_indices = @transform_8, window_bounds = array<i64: 1, 1, 128>}, {transform_indices = @transform_9, window_bounds = array<i64: 1, 128, 32>}, {transform_indices = @transform_10, window_bounds = array<i64: 1, 1, 32>}, {transform_indices = @transform_11, window_bounds = array<i64: 1, 1, 32>}, {transform_indices = @transform_12, window_bounds = array<i64: 1, 1, 32>}, {pipeline_mode = #tpu.pipeline_mode<synchronous>, transform_indices = @transform_13, window_bounds = array<i64: 1, 32>}, {pipeline_mode = #tpu.pipeline_mode<synchronous>, transform_indices = @transform_14, window_bounds = array<i64: 1, 32>}, {transform_indices = @transform_15, window_bounds = array<i64: 1, 8, 32>}]} {
    %c0_i32 = arith.constant 0 : i32
    %0 = arith.cmpi eq, %arg1, %c0_i32 : i32
    %1 = arith.extui %0 : i1 to i32
    %c0_i32_0 = arith.constant 0 : i32
    %2 = arith.cmpi ne, %1, %c0_i32_0 : i32
    scf.if %2 {
      %c0_63 = arith.constant 0 : index
      %c0_64 = arith.constant 0 : index
      %c0_65 = arith.constant 0 : index
      %153 = vector.load %arg2[%c0_63, %c0_64, %c0_65] : memref<1x8x32xf32, #tpu.memory_space<vmem>>, vector<1x8x32xf32>
      %154 = vector.shape_cast %153 : vector<1x8x32xf32> to vector<8x32xf32>
      %c0_66 = arith.constant 0 : index
      %c0_67 = arith.constant 0 : index
      %155 = vector.load %arg18[%c0_66, %c0_67] : memref<8x32xf32, #tpu.memory_space<vmem>>, vector<8x32xf32>
      tpu.vector_store %arg18[%c0_66, %c0_67], %154 {strides = array<i32>} : memref<8x32xf32, #tpu.memory_space<vmem>>, vector<8x32xf32>,
    } else {
    }
    %c0 = arith.constant 0 : index
    %c0_1 = arith.constant 0 : index
    %3 = vector.load %arg18[%c0, %c0_1] : memref<8x32xf32, #tpu.memory_space<vmem>>, vector<8x32xf32>
    %4 = arith.truncf %3 : vector<8x32xf32> to vector<8x32xbf16>
    %c0_2 = arith.constant 0 : index
    %c0_3 = arith.constant 0 : index
    %c0_4 = arith.constant 0 : index
    %5 = vector.load %arg3[%c0_2, %c0_3, %c0_4] : memref<1x32x96xbf16, #tpu.memory_space<vmem>>, vector<1x32x96xbf16>
    %6 = vector.shape_cast %5 : vector<1x32x96xbf16> to vector<32x96xbf16>
    %cst = arith.constant dense<0.000000e+00> : vector<8x96xf32>
    %7 = tpu.matmul %4, %6, %cst {dimension_numbers = #tpu.dot_dimension_numbers<[1], [0], [0], [1], [0, 0, 1, 1], [], []>} : vector<8x32xbf16>, vector<32x96xbf16>, vector<8x96xf32> -> vector<8x96xf32>
    %c0_5 = arith.constant 0 : index
    %c0_6 = arith.constant 0 : index
    %c0_7 = arith.constant 0 : index
    %8 = vector.load %arg4[%c0_5, %c0_6, %c0_7] : memref<1x1x96xf32, #tpu.memory_space<vmem>>, vector<1x1x96xf32>
    %9 = vector.shape_cast %8 : vector<1x1x96xf32> to vector<1x96xf32>
    %10 = vector.broadcast %9 : vector<1x96xf32> to vector<8x96xf32>
    %11 = arith.addf %7, %10 : vector<8x96xf32>
    %12 = vector.extract_strided_slice %11 {offsets = [0, 0], sizes = [8, 32], strides = [1, 1]} : vector<8x96xf32> to vector<8x32xf32>
    %13 = vector.extract_strided_slice %11 {offsets = [0, 32], sizes = [8, 32], strides = [1, 1]} : vector<8x96xf32> to vector<8x32xf32>
    %14 = vector.extract_strided_slice %11 {offsets = [0, 64], sizes = [8, 32], strides = [1, 1]} : vector<8x96xf32> to vector<8x32xf32>
    %15 = vector.extract_strided_slice %12 {offsets = [0, 0], sizes = [8, 8], strides = [1, 1]} : vector<8x32xf32> to vector<8x8xf32>
    %16 = vector.extract_strided_slice %12 {offsets = [0, 8], sizes = [8, 8], strides = [1, 1]} : vector<8x32xf32> to vector<8x8xf32>
    %17 = vector.extract_strided_slice %12 {offsets = [0, 16], sizes = [8, 8], strides = [1, 1]} : vector<8x32xf32> to vector<8x8xf32>
    %18 = vector.extract_strided_slice %12 {offsets = [0, 24], sizes = [8, 8], strides = [1, 1]} : vector<8x32xf32> to vector<8x8xf32>
    %19 = vector.shape_cast %15 : vector<8x8xf32> to vector<1x8x8xf32>
    %20 = vector.shape_cast %16 : vector<8x8xf32> to vector<1x8x8xf32>
    %21 = vector.shape_cast %17 : vector<8x8xf32> to vector<1x8x8xf32>
    %22 = vector.shape_cast %18 : vector<8x8xf32> to vector<1x8x8xf32>
    %23 = tpu.concatenate %19, %20, %21, %22 in 0 : vector<1x8x8xf32>, vector<1x8x8xf32>, vector<1x8x8xf32>, vector<1x8x8xf32> -> vector<4x8x8xf32>
    %24 = vector.extract_strided_slice %13 {offsets = [0, 0], sizes = [8, 8], strides = [1, 1]} : vector<8x32xf32> to vector<8x8xf32>
    %25 = vector.extract_strided_slice %13 {offsets = [0, 8], sizes = [8, 8], strides = [1, 1]} : vector<8x32xf32> to vector<8x8xf32>
    %26 = vector.extract_strided_slice %13 {offsets = [0, 16], sizes = [8, 8], strides = [1, 1]} : vector<8x32xf32> to vector<8x8xf32>
    %27 = vector.extract_strided_slice %13 {offsets = [0, 24], sizes = [8, 8], strides = [1, 1]} : vector<8x32xf32> to vector<8x8xf32>
    %28 = vector.shape_cast %24 : vector<8x8xf32> to vector<1x8x8xf32>
    %29 = vector.shape_cast %25 : vector<8x8xf32> to vector<1x8x8xf32>
    %30 = vector.shape_cast %26 : vector<8x8xf32> to vector<1x8x8xf32>
    %31 = vector.shape_cast %27 : vector<8x8xf32> to vector<1x8x8xf32>
    %32 = tpu.concatenate %28, %29, %30, %31 in 0 : vector<1x8x8xf32>, vector<1x8x8xf32>, vector<1x8x8xf32>, vector<1x8x8xf32> -> vector<4x8x8xf32>
    %33 = vector.extract_strided_slice %14 {offsets = [0, 0], sizes = [8, 8], strides = [1, 1]} : vector<8x32xf32> to vector<8x8xf32>
    %34 = vector.extract_strided_slice %14 {offsets = [0, 8], sizes = [8, 8], strides = [1, 1]} : vector<8x32xf32> to vector<8x8xf32>
    %35 = vector.extract_strided_slice %14 {offsets = [0, 16], sizes = [8, 8], strides = [1, 1]} : vector<8x32xf32> to vector<8x8xf32>
    %36 = vector.extract_strided_slice %14 {offsets = [0, 24], sizes = [8, 8], strides = [1, 1]} : vector<8x32xf32> to vector<8x8xf32>
    %37 = vector.shape_cast %33 : vector<8x8xf32> to vector<1x8x8xf32>
    %38 = vector.shape_cast %34 : vector<8x8xf32> to vector<1x8x8xf32>
    %39 = vector.shape_cast %35 : vector<8x8xf32> to vector<1x8x8xf32>
    %40 = vector.shape_cast %36 : vector<8x8xf32> to vector<1x8x8xf32>
    %41 = tpu.concatenate %37, %38, %39, %40 in 0 : vector<1x8x8xf32>, vector<1x8x8xf32>, vector<1x8x8xf32>, vector<1x8x8xf32> -> vector<4x8x8xf32>
    %42 = arith.truncf %23 : vector<4x8x8xf32> to vector<4x8x8xbf16>
    %43 = arith.truncf %32 : vector<4x8x8xf32> to vector<4x8x8xbf16>
    %44 = arith.truncf %41 : vector<4x8x8xf32> to vector<4x8x8xbf16>
    "tpu.trace_start"() <{level = 10 : i32, message = "hqd,hkd->hqk"}> : () -> ()
    %cst_8 = arith.constant dense<0.000000e+00> : vector<4x8x8xf32>
    %45 = tpu.matmul %42, %43, %cst_8 {dimension_numbers = #tpu.dot_dimension_numbers<[2], [2], [1], [1], [0, 0, 0, 1, 1, 1], [0], [0]>} : vector<4x8x8xbf16>, vector<4x8x8xbf16>, vector<4x8x8xf32> -> vector<4x8x8xf32>
    "tpu.trace_stop"() : () -> ()
    %cst_9 = arith.constant 0.353553385 : f32
    %46 = vector.broadcast %cst_9 : f32 to vector<4x8x8xf32>
    %47 = arith.mulf %45, %46 : vector<4x8x8xf32>
    %48 = tpu.iota {dimensions = array<i32: 0>} : vector<8x8xi32>
    %49 = tpu.iota {dimensions = array<i32: 1>} : vector<8x8xi32>
    %50 = arith.cmpi sle, %49, %48 : vector<8x8xi32>
    %51 = vector.shape_cast %50 : vector<8x8xi1> to vector<1x8x8xi1>
    %cst_10 = arith.constant -1.000000e+30 : f32
    %52 = vector.shape_cast %51 : vector<1x8x8xi1> to vector<1x8x8xi1>
    %53 = vector.broadcast %52 : vector<1x8x8xi1> to vector<4x8x8xi1>
    %54 = vector.broadcast %cst_10 : f32 to vector<4x8x8xf32>
    %55 = arith.select %53, %47, %54 : vector<4x8x8xi1>, vector<4x8x8xf32>
    %cst_11 = arith.constant dense<0xFF800000> : vector<4x8xf32>
    %56 = vector.multi_reduction <maximumf>, %55, %cst_11 [2] : vector<4x8x8xf32> to vector<4x8xf32>
    %57 = vector.shape_cast %56 : vector<4x8xf32> to vector<4x8x1xf32>
    %58 = vector.broadcast %57 : vector<4x8x1xf32> to vector<4x8x8xf32>
    %59 = arith.subf %55, %58 : vector<4x8x8xf32>
    %60 = math.exp %59 : vector<4x8x8xf32>
    %cst_12 = arith.constant dense<0.000000e+00> : vector<4x8xf32>
    %61 = vector.multi_reduction <add>, %60, %cst_12 [2] : vector<4x8x8xf32> to vector<4x8xf32>
    %62 = vector.shape_cast %61 : vector<4x8xf32> to vector<4x8x1xf32>
    %63 = tpu.reciprocal %62 {approx = true} : vector<4x8x1xf32> -> vector<4x8x1xf32>
    %64 = vector.broadcast %63 : vector<4x8x1xf32> to vector<4x8x8xf32>
    %65 = arith.mulf %60, %64 : vector<4x8x8xf32>
    %66 = arith.truncf %65 : vector<4x8x8xf32> to vector<4x8x8xbf16>
    "tpu.trace_start"() <{level = 10 : i32, message = "hqk,hkd->hqd"}> : () -> ()
    %cst_13 = arith.constant dense<0.000000e+00> : vector<4x8x8xf32>
    %67 = tpu.matmul %66, %44, %cst_13 {dimension_numbers = #tpu.dot_dimension_numbers<[2], [1], [1], [2], [0, 0, 0, 1, 1, 2], [0], [0]>} : vector<4x8x8xbf16>, vector<4x8x8xbf16>, vector<4x8x8xf32> -> vector<4x8x8xf32>
    "tpu.trace_stop"() : () -> ()
    %68 = arith.truncf %67 : vector<4x8x8xf32> to vector<4x8x8xbf16>
    %c0_14 = arith.constant 0 : index
    %c0_15 = arith.constant 0 : index
    %c0_16 = arith.constant 0 : index
    %c0_17 = arith.constant 0 : index
    %69 = vector.load %arg5[%c0_14, %c0_15, %c0_16, %c0_17] : memref<1x4x8x32xbf16, #tpu.memory_space<vmem>>, vector<1x4x8x32xbf16>
    %70 = vector.shape_cast %69 : vector<1x4x8x32xbf16> to vector<4x8x32xbf16>
    "tpu.trace_start"() <{level = 10 : i32, message = "hqd,hdo->hqo"}> : () -> ()
    %cst_18 = arith.constant dense<0.000000e+00> : vector<4x8x32xf32>
    %71 = tpu.matmul %68, %70, %cst_18 {dimension_numbers = #tpu.dot_dimension_numbers<[2], [1], [1], [2], [0, 0, 0, 1, 1, 2], [0], [0]>} : vector<4x8x8xbf16>, vector<4x8x32xbf16>, vector<4x8x32xf32> -> vector<4x8x32xf32>
    "tpu.trace_stop"() : () -> ()
    %cst_19 = arith.constant dense<0.000000e+00> : vector<8x32xf32>
    %72 = vector.multi_reduction <add>, %71, %cst_19 [0] : vector<4x8x32xf32> to vector<8x32xf32>
    %c0_20 = arith.constant 0 : index
    %c0_21 = arith.constant 0 : index
    %c0_22 = arith.constant 0 : index
    %73 = vector.load %arg6[%c0_20, %c0_21, %c0_22] : memref<1x1x32xf32, #tpu.memory_space<vmem>>, vector<1x1x32xf32>
    %74 = vector.shape_cast %73 : vector<1x1x32xf32> to vector<1x32xf32>
    %75 = vector.broadcast %74 : vector<1x32xf32> to vector<8x32xf32>
    %76 = arith.addf %72, %75 : vector<8x32xf32>
    %77 = arith.addf %3, %76 : vector<8x32xf32>
    %c0_23 = arith.constant 0 : index
    %c0_24 = arith.constant 0 : index
    %c0_25 = arith.constant 0 : index
    %78 = vector.load %arg7[%c0_23, %c0_24, %c0_25] : memref<1x1x32xf32, #tpu.memory_space<vmem>>, vector<1x1x32xf32>
    %79 = vector.shape_cast %78 : vector<1x1x32xf32> to vector<1x32xf32>
    %c0_26 = arith.constant 0 : index
    %c0_27 = arith.constant 0 : index
    %c0_28 = arith.constant 0 : index
    %80 = vector.load %arg8[%c0_26, %c0_27, %c0_28] : memref<1x1x32xf32, #tpu.memory_space<vmem>>, vector<1x1x32xf32>
    %81 = vector.shape_cast %80 : vector<1x1x32xf32> to vector<1x32xf32>
    %cst_29 = arith.constant dense<0.000000e+00> : vector<8xf32>
    %82 = vector.multi_reduction <add>, %77, %cst_29 [1] : vector<8x32xf32> to vector<8xf32>
    %83 = vector.shape_cast %82 : vector<8xf32> to vector<8x1xf32>
    %cst_30 = arith.constant 3.200000e+01 : f32
    %84 = vector.broadcast %cst_30 : f32 to vector<8x1xf32>
    %85 = arith.divf %83, %84 : vector<8x1xf32>
    %86 = vector.broadcast %85 : vector<8x1xf32> to vector<8x32xf32>
    %87 = arith.subf %77, %86 : vector<8x32xf32>
    %88 = arith.mulf %87, %87 : vector<8x32xf32>
    %cst_31 = arith.constant dense<0.000000e+00> : vector<8xf32>
    %89 = vector.multi_reduction <add>, %88, %cst_31 [1] : vector<8x32xf32> to vector<8xf32>
    %90 = vector.shape_cast %89 : vector<8xf32> to vector<8x1xf32>
    %cst_32 = arith.constant 3.200000e+01 : f32
    %91 = vector.broadcast %cst_32 : f32 to vector<8x1xf32>
    %92 = arith.divf %90, %91 : vector<8x1xf32>
    %93 = vector.broadcast %85 : vector<8x1xf32> to vector<8x32xf32>
    %94 = arith.subf %77, %93 : vector<8x32xf32>
    %cst_33 = arith.constant 9.99999974E-6 : f32
    %95 = vector.broadcast %cst_33 : f32 to vector<8x1xf32>
    %96 = arith.addf %92, %95 : vector<8x1xf32>
    %97 = math.rsqrt %96 : vector<8x1xf32>
    %98 = vector.broadcast %97 : vector<8x1xf32> to vector<8x32xf32>
    %99 = arith.mulf %94, %98 : vector<8x32xf32>
    %100 = vector.broadcast %79 : vector<1x32xf32> to vector<8x32xf32>
    %101 = arith.mulf %99, %100 : vector<8x32xf32>
    %102 = vector.broadcast %81 : vector<1x32xf32> to vector<8x32xf32>
    %103 = arith.addf %101, %102 : vector<8x32xf32>
    %104 = arith.truncf %103 : vector<8x32xf32> to vector<8x32xbf16>
    %c0_34 = arith.constant 0 : index
    %c0_35 = arith.constant 0 : index
    %c0_36 = arith.constant 0 : index
    %105 = vector.load %arg9[%c0_34, %c0_35, %c0_36] : memref<1x32x128xbf16, #tpu.memory_space<vmem>>, vector<1x32x128xbf16>
    %106 = vector.shape_cast %105 : vector<1x32x128xbf16> to vector<32x128xbf16>
    %cst_37 = arith.constant dense<0.000000e+00> : vector<8x128xf32>
    %107 = tpu.matmul %104, %106, %cst_37 {dimension_numbers = #tpu.dot_dimension_numbers<[1], [0], [0], [1], [0, 0, 1, 1], [], []>} : vector<8x32xbf16>, vector<32x128xbf16>, vector<8x128xf32> -> vector<8x128xf32>
    %c0_38 = arith.constant 0 : index
    %c0_39 = arith.constant 0 : index
    %c0_40 = arith.constant 0 : index
    %108 = vector.load %arg10[%c0_38, %c0_39, %c0_40] : memref<1x1x128xf32, #tpu.memory_space<vmem>>, vector<1x1x128xf32>
    %109 = vector.shape_cast %108 : vector<1x1x128xf32> to vector<1x128xf32>
    %110 = vector.broadcast %109 : vector<1x128xf32> to vector<8x128xf32>
    %111 = arith.addf %107, %110 : vector<8x128xf32>
    %cst_41 = arith.constant 0.000000e+00 : f32
    %112 = vector.broadcast %cst_41 : f32 to vector<8x128xf32>
    %113 = arith.maximumf %111, %112 : vector<8x128xf32>
    %114 = arith.truncf %113 : vector<8x128xf32> to vector<8x128xbf16>
    %c0_42 = arith.constant 0 : index
    %c0_43 = arith.constant 0 : index
    %c0_44 = arith.constant 0 : index
    %115 = vector.load %arg11[%c0_42, %c0_43, %c0_44] : memref<1x128x32xbf16, #tpu.memory_space<vmem>>, vector<1x128x32xbf16>
    %116 = vector.shape_cast %115 : vector<1x128x32xbf16> to vector<128x32xbf16>
    %cst_45 = arith.constant dense<0.000000e+00> : vector<8x32xf32>
    %117 = tpu.matmul %114, %116, %cst_45 {dimension_numbers = #tpu.dot_dimension_numbers<[1], [0], [0], [1], [0, 0, 1, 1], [], []>} : vector<8x128xbf16>, vector<128x32xbf16>, vector<8x32xf32> -> vector<8x32xf32>
    %c0_46 = arith.constant 0 : index
    %c0_47 = arith.constant 0 : index
    %c0_48 = arith.constant 0 : index
    %118 = vector.load %arg12[%c0_46, %c0_47, %c0_48] : memref<1x1x32xf32, #tpu.memory_space<vmem>>, vector<1x1x32xf32>
    %119 = vector.shape_cast %118 : vector<1x1x32xf32> to vector<1x32xf32>
    %120 = vector.broadcast %119 : vector<1x32xf32> to vector<8x32xf32>
    %121 = arith.addf %117, %120 : vector<8x32xf32>
    %122 = arith.addf %103, %121 : vector<8x32xf32>
    %c0_49 = arith.constant 0 : index
    %c0_50 = arith.constant 0 : index
    %c0_51 = arith.constant 0 : index
    %123 = vector.load %arg13[%c0_49, %c0_50, %c0_51] : memref<1x1x32xf32, #tpu.memory_space<vmem>>, vector<1x1x32xf32>
    %124 = vector.shape_cast %123 : vector<1x1x32xf32> to vector<1x32xf32>
    %c0_52 = arith.constant 0 : index
    %c0_53 = arith.constant 0 : index
    %c0_54 = arith.constant 0 : index
    %125 = vector.load %arg14[%c0_52, %c0_53, %c0_54] : memref<1x1x32xf32, #tpu.memory_space<vmem>>, vector<1x1x32xf32>
    %126 = vector.shape_cast %125 : vector<1x1x32xf32> to vector<1x32xf32>
    %cst_55 = arith.constant dense<0.000000e+00> : vector<8xf32>
    %127 = vector.multi_reduction <add>, %122, %cst_55 [1] : vector<8x32xf32> to vector<8xf32>
    %128 = vector.shape_cast %127 : vector<8xf32> to vector<8x1xf32>
    %cst_56 = arith.constant 3.200000e+01 : f32
    %129 = vector.broadcast %cst_56 : f32 to vector<8x1xf32>
    %130 = arith.divf %128, %129 : vector<8x1xf32>
    %131 = vector.broadcast %130 : vector<8x1xf32> to vector<8x32xf32>
    %132 = arith.subf %122, %131 : vector<8x32xf32>
    %133 = arith.mulf %132, %132 : vector<8x32xf32>
    %cst_57 = arith.constant dense<0.000000e+00> : vector<8xf32>
    %134 = vector.multi_reduction <add>, %133, %cst_57 [1] : vector<8x32xf32> to vector<8xf32>
    %135 = vector.shape_cast %134 : vector<8xf32> to vector<8x1xf32>
    %cst_58 = arith.constant 3.200000e+01 : f32
    %136 = vector.broadcast %cst_58 : f32 to vector<8x1xf32>
    %137 = arith.divf %135, %136 : vector<8x1xf32>
    %138 = vector.broadcast %130 : vector<8x1xf32> to vector<8x32xf32>
    %139 = arith.subf %122, %138 : vector<8x32xf32>
    %cst_59 = arith.constant 9.99999974E-6 : f32
    %140 = vector.broadcast %cst_59 : f32 to vector<8x1xf32>
    %141 = arith.addf %137, %140 : vector<8x1xf32>
    %142 = math.rsqrt %141 : vector<8x1xf32>
    %143 = vector.broadcast %142 : vector<8x1xf32> to vector<8x32xf32>
    %144 = arith.mulf %139, %143 : vector<8x32xf32>
    %145 = vector.broadcast %124 : vector<1x32xf32> to vector<8x32xf32>
    %146 = arith.mulf %144, %145 : vector<8x32xf32>
    %147 = vector.broadcast %126 : vector<1x32xf32> to vector<8x32xf32>
    %148 = arith.addf %146, %147 : vector<8x32xf32>
    %c0_60 = arith.constant 0 : index
    %c0_61 = arith.constant 0 : index
    %149 = vector.load %arg18[%c0_60, %c0_61] : memref<8x32xf32, #tpu.memory_space<vmem>>, vector<8x32xf32>
    tpu.vector_store %arg18[%c0_60, %c0_61], %148 {strides = array<i32>} : memref<8x32xf32, #tpu.memory_space<vmem>>, vector<8x32xf32>,
    %c1_i32 = arith.constant 1 : i32
    %150 = arith.cmpi eq, %arg1, %c1_i32 : i32
    %151 = arith.extui %150 : i1 to i32
    %c0_i32_62 = arith.constant 0 : i32
    %152 = arith.cmpi ne, %151, %c0_i32_62 : i32
    scf.if %152 {
      %c0_63 = arith.constant 0 : index
      %c0_64 = arith.constant 0 : index
      %153 = vector.load %arg15[%c0_63, %c0_64] : memref<1x32xf32, #tpu.memory_space<vmem>>, vector<1x32xf32>
      %c0_65 = arith.constant 0 : index
      %c0_66 = arith.constant 0 : index
      %154 = vector.load %arg16[%c0_65, %c0_66] : memref<1x32xf32, #tpu.memory_space<vmem>>, vector<1x32xf32>
      %cst_67 = arith.constant dense<0.000000e+00> : vector<8xf32>
      %155 = vector.multi_reduction <add>, %148, %cst_67 [1] : vector<8x32xf32> to vector<8xf32>
      %156 = vector.shape_cast %155 : vector<8xf32> to vector<8x1xf32>
      %cst_68 = arith.constant 3.200000e+01 : f32
      %157 = vector.broadcast %cst_68 : f32 to vector<8x1xf32>
      %158 = arith.divf %156, %157 : vector<8x1xf32>
      %159 = vector.broadcast %158 : vector<8x1xf32> to vector<8x32xf32>
      %160 = arith.subf %148, %159 : vector<8x32xf32>
      %161 = arith.mulf %160, %160 : vector<8x32xf32>
      %cst_69 = arith.constant dense<0.000000e+00> : vector<8xf32>
      %162 = vector.multi_reduction <add>, %161, %cst_69 [1] : vector<8x32xf32> to vector<8xf32>
      %163 = vector.shape_cast %162 : vector<8xf32> to vector<8x1xf32>
      %cst_70 = arith.constant 3.200000e+01 : f32
      %164 = vector.broadcast %cst_70 : f32 to vector<8x1xf32>
      %165 = arith.divf %163, %164 : vector<8x1xf32>
      %166 = vector.broadcast %158 : vector<8x1xf32> to vector<8x32xf32>
      %167 = arith.subf %148, %166 : vector<8x32xf32>
      %cst_71 = arith.constant 9.99999974E-6 : f32
      %168 = vector.broadcast %cst_71 : f32 to vector<8x1xf32>
      %169 = arith.addf %165, %168 : vector<8x1xf32>
      %170 = math.rsqrt %169 : vector<8x1xf32>
      %171 = vector.broadcast %170 : vector<8x1xf32> to vector<8x32xf32>
      %172 = arith.mulf %167, %171 : vector<8x32xf32>
      %173 = vector.broadcast %153 : vector<1x32xf32> to vector<8x32xf32>
      %174 = arith.mulf %172, %173 : vector<8x32xf32>
      %175 = vector.broadcast %154 : vector<1x32xf32> to vector<8x32xf32>
      %176 = arith.addf %174, %175 : vector<8x32xf32>
      %c0_72 = arith.constant 0 : index
      %c0_73 = arith.constant 0 : index
      %c0_74 = arith.constant 0 : index
      %177 = vector.load %arg17[%c0_72, %c0_73, %c0_74] : memref<1x8x32xf32, #tpu.memory_space<vmem>>, vector<1x8x32xf32>
      %178 = vector.shape_cast %177 : vector<1x8x32xf32> to vector<8x32xf32>
      %179 = vector.shape_cast %176 : vector<8x32xf32> to vector<1x8x32xf32>
      tpu.vector_store %arg17[%c0_72, %c0_73, %c0_74], %179 {strides = array<i32>} : memref<1x8x32xf32, #tpu.memory_space<vmem>>, vector<1x8x32xf32>,
    } else {
    }
    return
  }
  func.func @transform_0(%arg0: i32, %arg1: i32) -> (i32, i32, i32) {
    %c0_i32 = arith.constant 0 : i32
    %c0_i32_0 = arith.constant 0 : i32
    %c0_i32_1 = arith.constant 0 : i32
    return %arg0, %c0_i32, %c0_i32_0 : i32, i32, i32
  }
  func.func @transform_1(%arg0: i32, %arg1: i32) -> (i32, i32, i32) {
    %c0_i32 = arith.constant 0 : i32
    %c0_i32_0 = arith.constant 0 : i32
    %c0_i32_1 = arith.constant 0 : i32
    return %arg1, %c0_i32, %c0_i32_0 : i32, i32, i32
  }
  func.func @transform_2(%arg0: i32, %arg1: i32) -> (i32, i32, i32) {
    %c0_i32 = arith.constant 0 : i32
    %c0_i32_0 = arith.constant 0 : i32
    %c0_i32_1 = arith.constant 0 : i32
    return %arg1, %c0_i32, %c0_i32_0 : i32, i32, i32
  }
  func.func @transform_3(%arg0: i32, %arg1: i32) -> (i32, i32, i32, i32) {
    %c0_i32 = arith.constant 0 : i32
    %c0_i32_0 = arith.constant 0 : i32
    %c0_i32_1 = arith.constant 0 : i32
    %c0_i32_2 = arith.constant 0 : i32
    return %arg1, %c0_i32, %c0_i32_0, %c0_i32_1 : i32, i32, i32, i32
  }
  func.func @transform_4(%arg0: i32, %arg1: i32) -> (i32, i32, i32) {
    %c0_i32 = arith.constant 0 : i32
    %c0_i32_0 = arith.constant 0 : i32
    %c0_i32_1 = arith.constant 0 : i32
    return %arg1, %c0_i32, %c0_i32_0 : i32, i32, i32
  }
  func.func @transform_5(%arg0: i32, %arg1: i32) -> (i32, i32, i32) {
    %c0_i32 = arith.constant 0 : i32
    %c0_i32_0 = arith.constant 0 : i32
    %c0_i32_1 = arith.constant 0 : i32
    return %arg1, %c0_i32, %c0_i32_0 : i32, i32, i32
  }
  func.func @transform_6(%arg0: i32, %arg1: i32) -> (i32, i32, i32) {
    %c0_i32 = arith.constant 0 : i32
    %c0_i32_0 = arith.constant 0 : i32
    %c0_i32_1 = arith.constant 0 : i32
    return %arg1, %c0_i32, %c0_i32_0 : i32, i32, i32
  }
  func.func @transform_7(%arg0: i32, %arg1: i32) -> (i32, i32, i32) {
    %c0_i32 = arith.constant 0 : i32
    %c0_i32_0 = arith.constant 0 : i32
    %c0_i32_1 = arith.constant 0 : i32
    return %arg1, %c0_i32, %c0_i32_0 : i32, i32, i32
  }
  func.func @transform_8(%arg0: i32, %arg1: i32) -> (i32, i32, i32) {
    %c0_i32 = arith.constant 0 : i32
    %c0_i32_0 = arith.constant 0 : i32
    %c0_i32_1 = arith.constant 0 : i32
    return %arg1, %c0_i32, %c0_i32_0 : i32, i32, i32
  }
  func.func @transform_9(%arg0: i32, %arg1: i32) -> (i32, i32, i32) {
    %c0_i32 = arith.constant 0 : i32
    %c0_i32_0 = arith.constant 0 : i32
    %c0_i32_1 = arith.constant 0 : i32
    return %arg1, %c0_i32, %c0_i32_0 : i32, i32, i32
  }
  func.func @transform_10(%arg0: i32, %arg1: i32) -> (i32, i32, i32) {
    %c0_i32 = arith.constant 0 : i32
    %c0_i32_0 = arith.constant 0 : i32
    %c0_i32_1 = arith.constant 0 : i32
    return %arg1, %c0_i32, %c0_i32_0 : i32, i32, i32
  }
  func.func @transform_11(%arg0: i32, %arg1: i32) -> (i32, i32, i32) {
    %c0_i32 = arith.constant 0 : i32
    %c0_i32_0 = arith.constant 0 : i32
    %c0_i32_1 = arith.constant 0 : i32
    return %arg1, %c0_i32, %c0_i32_0 : i32, i32, i32
  }
  func.func @transform_12(%arg0: i32, %arg1: i32) -> (i32, i32, i32) {
    %c0_i32 = arith.constant 0 : i32
    %c0_i32_0 = arith.constant 0 : i32
    %c0_i32_1 = arith.constant 0 : i32
    return %arg1, %c0_i32, %c0_i32_0 : i32, i32, i32
  }
  func.func @transform_13(%arg0: i32, %arg1: i32) -> (i32, i32) {
    %c0_i32 = arith.constant 0 : i32
    %c0_i32_0 = arith.constant 0 : i32
    %c0_i32_1 = arith.constant 0 : i32
    return %c0_i32, %c0_i32_0 : i32, i32
  }
  func.func @transform_14(%arg0: i32, %arg1: i32) -> (i32, i32) {
    %c0_i32 = arith.constant 0 : i32
    %c0_i32_0 = arith.constant 0 : i32
    %c0_i32_1 = arith.constant 0 : i32
    return %c0_i32, %c0_i32_0 : i32, i32
  }
  func.func @transform_15(%arg0: i32, %arg1: i32) -> (i32, i32, i32) {
    %c0_i32 = arith.constant 0 : i32
    %c0_i32_0 = arith.constant 0 : i32
    %c0_i32_1 = arith.constant 0 : i32
    return %arg0, %c0_i32, %c0_i32_0 : i32, i32, i32
  }
}

</mosaic_0001>

<llo_original>
// kernel: tpu_custom_call.1
$region0: #{tpu_custom_call.1}
  #allocation0 [shape = 'u32[]', space=smem, size = 0x4, offset = 0x4, fixed_abs, tag = 'smem constant byte address 0x4 - core index']
  #allocation1 [shape = 'u32[144,128]{1,0:T(1,128)}', space=vmem, size = 0x12000, scoped, tag = 'internal scratch']
  #allocation2 [shape = 'f32[8,32]{1,0:T(8,128)}', space=vmem, size = 0x1000, scoped, tag = 'scratch operand']
  %s0 = inlined_call_operand.vmem [shape: f32[2,8,32], index: 0, kind: input, shape index: {}]
  %s1 = inlined_call_operand.vmem [shape: bf16[2,32,96], index: 1, kind: input, shape index: {}]
  %s2 = inlined_call_operand.vmem [shape: f32[2,1,96], index: 2, kind: input, shape index: {}]
  %s3 = inlined_call_operand.vmem [shape: bf16[2,4,8,32], index: 3, kind: input, shape index: {}]
  %s4 = inlined_call_operand.vmem [shape: f32[2,1,32], index: 4, kind: input, shape index: {}]
  %s5 = inlined_call_operand.vmem [shape: f32[2,1,32], index: 5, kind: input, shape index: {}]
  %s6 = inlined_call_operand.vmem [shape: f32[2,1,32], index: 6, kind: input, shape index: {}]
  %s7 = inlined_call_operand.vmem [shape: bf16[2,32,128], index: 7, kind: input, shape index: {}]
  %s8 = inlined_call_operand.vmem [shape: f32[2,1,128], index: 8, kind: input, shape index: {}]
  %s9 = inlined_call_operand.vmem [shape: bf16[2,128,32], index: 9, kind: input, shape index: {}]
  %s10 = inlined_call_operand.vmem [shape: f32[2,1,32], index: 10, kind: input, shape index: {}]
  %s11 = inlined_call_operand.vmem [shape: f32[2,1,32], index: 11, kind: input, shape index: {}]
  %s12 = inlined_call_operand.vmem [shape: f32[2,1,32], index: 12, kind: input, shape index: {}]
  %s13 = inlined_call_operand.vmem [shape: f32[1,32], index: 13, kind: input, shape index: {}]
  %s14 = inlined_call_operand.vmem [shape: f32[1,32], index: 14, kind: input, shape index: {}]
  %s15 = inlined_call_operand.hbm [shape: f32[2,8,32], index: 15, kind: output, shape index: {}]
  %s16 = sld [smem:[#allocation0]]
  $region101: #{tpu_custom_call.1} parent=0
    _
  %s18 = ssub.s32 1, %s16
  %s19 = scalar_select 0, %s18, %s16
  $region1: #{tpu_custom_call.1} parent=0
    #allocation3 [shape = 'u8[8192]{0}', space=vmem, size = 0x2000, scoped, tag = 'output window, operand 0']
    #allocation4 [shape = 's32[2]{0}', space=sflag, size = 0x8, scoped, tag = 'scoped memory for tpu_custom_call.1']
    %20 = vsyncpa [#allocation4], 0
    %s21 = scalar_lea.sflag [#allocation4], 1
    %22 = vsyncpa %s21, 0
    loop: start=0, step=1, limit=6
    $region2: #{tpu_custom_call.1} parent=1 // loop_pre_header
      _
    $region3: #{tpu_custom_call.1} parent=1 // loop_header
      %s24 = sphi 0, %s28
      %p25 = scmp.ge.s32.totalorder %s24, 6
      %s31 = sphi 0, %s43
      %s32 = sphi 0, %s39
      %s33 = sphi 0, %s31
      %s34 = sphi 0, %s32
      %s35 = sphi 0, %s33
      %s36 = sphi 0, %s34
      %s46 = sphi 0, %s48
      %s49 = sphi 0, %s46
      %s50 = sphi 0, %s49
      %s66 = sphi 0, %s50
      %s72 = sphi 0, %s74
      %s75 = sphi 0, %s72
      %s76 = sphi 0, %s75
      %s92 = sphi 0, %s76
      %s98 = sphi 0, %s100
      %s101 = sphi 0, %s98
      %s102 = sphi 0, %s101
      %s118 = sphi 0, %s102
      %s124 = sphi 0, %s126
      %s127 = sphi 0, %s124
      %s128 = sphi 0, %s127
      %s144 = sphi 0, %s128
      %s150 = sphi 0, %s152
      %s153 = sphi 0, %s150
      %s154 = sphi 0, %s153
      %s170 = sphi 0, %s154
      %s176 = sphi 0, %s178
      %s179 = sphi 0, %s176
      %s180 = sphi 0, %s179
      %s196 = sphi 0, %s180
      %s202 = sphi 0, %s204
      %s205 = sphi 0, %s202
      %s206 = sphi 0, %s205
      %s222 = sphi 0, %s206
      %s228 = sphi 0, %s230
      %s231 = sphi 0, %s228
      %s232 = sphi 0, %s231
      %s248 = sphi 0, %s232
      %s254 = sphi 0, %s256
      %s257 = sphi 0, %s254
      %s258 = sphi 0, %s257
      %s274 = sphi 0, %s258
      %s280 = sphi 0, %s282
      %s283 = sphi 0, %s280
      %s284 = sphi 0, %s283
      %s300 = sphi 0, %s284
      %s306 = sphi 0, %s308
      %s309 = sphi 0, %s306
      %s310 = sphi 0, %s309
      %s326 = sphi 0, %s310
      %s332 = sphi 0, %s334
      %s335 = sphi 0, %s332
      %s336 = sphi 0, %s335
      %s352 = sphi 0, %s336
      %s358 = sphi 0, %s360
      %s361 = sphi 0, %s358
      %s362 = sphi 0, %s361
      %s378 = sphi 0, %s362
      %s382 = sphi 0, %s382
      %s384 = sphi 0, %s382
      %s385 = sphi 0, %s384
      %s399 = sphi 0, %s385
      %s403 = sphi 0, %s403
      %s405 = sphi 0, %s403
      %s406 = sphi 0, %s405
      %s420 = sphi 0, %s406
      %s426 = sphi 0, %s428
      %s429 = sphi 0, %s426
      %s430 = sphi 0, %s429
      %s446 = sphi 0, %s430
    $region4: #{tpu_custom_call.1} parent=1 // loop_header_branch
      %27 = sbr.rel (%p25) target = $region8
    $region5: #{tpu_custom_call.1} parent=1 // loop_body
      %s29 = ssub.s32 %s24, 1
      %s30 = ssub.s32 %s24, 2
      %s37 = sadd.s32 1, %s32
      %p38 = scmp.ge.s32.totalorder %s37, 2
      %s39 = scalar_select %p38, 0, %s37
      %s40 = sadd.s32 1, %s31
      %s41 = scalar_select %p38, %s40, %s31
      %p42 = scmp.ge.s32.totalorder %s41, 2
      %s43 = scalar_select %p42, 0, %s41
      %s44 = ssub.s32 %s31, %s43
      %p45 = scmp.eq.s32.totalorder %s44, 0
      %s47 = sadd.s32 %s46, 1
      %s48 = scalar_select %p45, %s46, %s47
      %p51 = pneg %p45
      %p52 = scmp.eq.s32.totalorder %s24, 3
      %p53 = por %p51, %p52
      %p54 = scmp.ne.s32.totalorder %s46, %s49
      %p55 = scmp.eq.s32.totalorder %s24, 0
      %p56 = por %p54, %p55
      %p57 = scmp.ne.s32.totalorder %s46, %s49
      %p58 = scmp.eq.s32.totalorder %s29, 3
      %p59 = por %p57, %p58
      %p60 = scmp.ne.s32.totalorder %s49, %s50
      %p61 = scmp.eq.s32.totalorder %s29, 0
      %p62 = por %p60, %p61
      %p63 = scmp.ne.s32.totalorder %s49, %s50
      %p64 = scmp.eq.s32.totalorder %s30, 3
      %p65 = por %p63, %p64
      %p67 = scmp.ne.s32.totalorder %s50, %s66
      %p68 = scmp.eq.s32.totalorder %s30, 0
      %p69 = por %p67, %p68
      %s70 = ssub.s32 %s32, %s39
      %p71 = scmp.eq.s32.totalorder %s70, 0
      %s73 = sadd.s32 %s72, 1
      %s74 = scalar_select %p71, %s72, %s73
      %p77 = pneg %p71
      %p78 = scmp.eq.s32.totalorder %s24, 3
      %p79 = por %p77, %p78
      %p80 = scmp.ne.s32.totalorder %s72, %s75
      %p81 = scmp.eq.s32.totalorder %s24, 0
      %p82 = por %p80, %p81
      %p83 = scmp.ne.s32.totalorder %s72, %s75
      %p84 = scmp.eq.s32.totalorder %s29, 3
      %p85 = por %p83, %p84
      %p86 = scmp.ne.s32.totalorder %s75, %s76
      %p87 = scmp.eq.s32.totalorder %s29, 0
      %p88 = por %p86, %p87
      %p89 = scmp.ne.s32.totalorder %s75, %s76
      %p90 = scmp.eq.s32.totalorder %s30, 3
      %p91 = por %p89, %p90
      %p93 = scmp.ne.s32.totalorder %s76, %s92
      %p94 = scmp.eq.s32.totalorder %s30, 0
      %p95 = por %p93, %p94
      %s96 = ssub.s32 %s32, %s39
      %p97 = scmp.eq.s32.totalorder %s96, 0
      %s99 = sadd.s32 %s98, 1
      %s100 = scalar_select %p97, %s98, %s99
      %p103 = pneg %p97
      %p104 = scmp.eq.s32.totalorder %s24, 3
      %p105 = por %p103, %p104
      %p106 = scmp.ne.s32.totalorder %s98, %s101
      %p107 = scmp.eq.s32.totalorder %s24, 0
      %p108 = por %p106, %p107
      %p109 = scmp.ne.s32.totalorder %s98, %s101
      %p110 = scmp.eq.s32.totalorder %s29, 3
      %p111 = por %p109, %p110
      %p112 = scmp.ne.s32.totalorder %s101, %s102
      %p113 = scmp.eq.s32.totalorder %s29, 0
      %p114 = por %p112, %p113
      %p115 = scmp.ne.s32.totalorder %s101, %s102
      %p116 = scmp.eq.s32.totalorder %s30, 3
      %p117 = por %p115, %p116
      %p119 = scmp.ne.s32.totalorder %s102, %s118
      %p120 = scmp.eq.s32.totalorder %s30, 0
      %p121 = por %p119, %p120
      %s122 = ssub.s32 %s32, %s39
      %p123 = scmp.eq.s32.totalorder %s122, 0
      %s125 = sadd.s32 %s124, 1
      %s126 = scalar_select %p123, %s124, %s125
      %p129 = pneg %p123
      %p130 = scmp.eq.s32.totalorder %s24, 3
      %p131 = por %p129, %p130
      %p132 = scmp.ne.s32.totalorder %s124, %s127
      %p133 = scmp.eq.s32.totalorder %s24, 0
      %p134 = por %p132, %p133
      %p135 = scmp.ne.s32.totalorder %s124, %s127
      %p136 = scmp.eq.s32.totalorder %s29, 3
      %p137 = por %p135, %p136
      %p138 = scmp.ne.s32.totalorder %s127, %s128
      %p139 = scmp.eq.s32.totalorder %s29, 0
      %p140 = por %p138, %p139
      %p141 = scmp.ne.s32.totalorder %s127, %s128
      %p142 = scmp.eq.s32.totalorder %s30, 3
      %p143 = por %p141, %p142
      %p145 = scmp.ne.s32.totalorder %s128, %s144
      %p146 = scmp.eq.s32.totalorder %s30, 0
      %p147 = por %p145, %p146
      %s148 = ssub.s32 %s32, %s39
      %p149 = scmp.eq.s32.totalorder %s148, 0
      %s151 = sadd.s32 %s150, 1
      %s152 = scalar_select %p149, %s150, %s151
      %p155 = pneg %p149
      %p156 = scmp.eq.s32.totalorder %s24, 3
      %p157 = por %p155, %p156
      %p158 = scmp.ne.s32.totalorder %s150, %s153
      %p159 = scmp.eq.s32.totalorder %s24, 0
      %p160 = por %p158, %p159
      %p161 = scmp.ne.s32.totalorder %s150, %s153
      %p162 = scmp.eq.s32.totalorder %s29, 3
      %p163 = por %p161, %p162
      %p164 = scmp.ne.s32.totalorder %s153, %s154
      %p165 = scmp.eq.s32.totalorder %s29, 0
      %p166 = por %p164, %p165
      %p167 = scmp.ne.s32.totalorder %s153, %s154
      %p168 = scmp.eq.s32.totalorder %s30, 3
      %p169 = por %p167, %p168
      %p171 = scmp.ne.s32.totalorder %s154, %s170
      %p172 = scmp.eq.s32.totalorder %s30, 0
      %p173 = por %p171, %p172
      %s174 = ssub.s32 %s32, %s39
      %p175 = scmp.eq.s32.totalorder %s174, 0
      %s177 = sadd.s32 %s176, 1
      %s178 = scalar_select %p175, %s176, %s177
      %p181 = pneg %p175
      %p182 = scmp.eq.s32.totalorder %s24, 3
      %p183 = por %p181, %p182
      %p184 = scmp.ne.s32.totalorder %s176, %s179
      %p185 = scmp.eq.s32.totalorder %s24, 0
      %p186 = por %p184, %p185
      %p187 = scmp.ne.s32.totalorder %s176, %s179
      %p188 = scmp.eq.s32.totalorder %s29, 3
      %p189 = por %p187, %p188
      %p190 = scmp.ne.s32.totalorder %s179, %s180
      %p191 = scmp.eq.s32.totalorder %s29, 0
      %p192 = por %p190, %p191
      %p193 = scmp.ne.s32.totalorder %s179, %s180
      %p194 = scmp.eq.s32.totalorder %s30, 3
      %p195 = por %p193, %p194
      %p197 = scmp.ne.s32.totalorder %s180, %s196
      %p198 = scmp.eq.s32.totalorder %s30, 0
      %p199 = por %p197, %p198
      %s200 = ssub.s32 %s32, %s39
      %p201 = scmp.eq.s32.totalorder %s200, 0
      %s203 = sadd.s32 %s202, 1
      %s204 = scalar_select %p201, %s202, %s203
      %p207 = pneg %p201
      %p208 = scmp.eq.s32.totalorder %s24, 3
      %p209 = por %p207, %p208
      %p210 = scmp.ne.s32.totalorder %s202, %s205
      %p211 = scmp.eq.s32.totalorder %s24, 0
      %p212 = por %p210, %p211
      %p213 = scmp.ne.s32.totalorder %s202, %s205
      %p214 = scmp.eq.s32.totalorder %s29, 3
      %p215 = por %p213, %p214
      %p216 = scmp.ne.s32.totalorder %s205, %s206
      %p217 = scmp.eq.s32.totalorder %s29, 0
      %p218 = por %p216, %p217
      %p219 = scmp.ne.s32.totalorder %s205, %s206
      %p220 = scmp.eq.s32.totalorder %s30, 3
      %p221 = por %p219, %p220
      %p223 = scmp.ne.s32.totalorder %s206, %s222
      %p224 = scmp.eq.s32.totalorder %s30, 0
      %p225 = por %p223, %p224
      %s226 = ssub.s32 %s32, %s39
      %p227 = scmp.eq.s32.totalorder %s226, 0
      %s229 = sadd.s32 %s228, 1
      %s230 = scalar_select %p227, %s228, %s229
      %p233 = pneg %p227
      %p234 = scmp.eq.s32.totalorder %s24, 3
      %p235 = por %p233, %p234
      %p236 = scmp.ne.s32.totalorder %s228, %s231
      %p237 = scmp.eq.s32.totalorder %s24, 0
      %p238 = por %p236, %p237
      %p239 = scmp.ne.s32.totalorder %s228, %s231
      %p240 = scmp.eq.s32.totalorder %s29, 3
      %p241 = por %p239, %p240
      %p242 = scmp.ne.s32.totalorder %s231, %s232
      %p243 = scmp.eq.s32.totalorder %s29, 0
      %p244 = por %p242, %p243
      %p245 = scmp.ne.s32.totalorder %s231, %s232
      %p246 = scmp.eq.s32.totalorder %s30, 3
      %p247 = por %p245, %p246
      %p249 = scmp.ne.s32.totalorder %s232, %s248
      %p250 = scmp.eq.s32.totalorder %s30, 0
      %p251 = por %p249, %p250
      %s252 = ssub.s32 %s32, %s39
      %p253 = scmp.eq.s32.totalorder %s252, 0
      %s255 = sadd.s32 %s254, 1
      %s256 = scalar_select %p253, %s254, %s255
      %p259 = pneg %p253
      %p260 = scmp.eq.s32.totalorder %s24, 3
      %p261 = por %p259, %p260
      %p262 = scmp.ne.s32.totalorder %s254, %s257
      %p263 = scmp.eq.s32.totalorder %s24, 0
      %p264 = por %p262, %p263
      %p265 = scmp.ne.s32.totalorder %s254, %s257
      %p266 = scmp.eq.s32.totalorder %s29, 3
      %p267 = por %p265, %p266
      %p268 = scmp.ne.s32.totalorder %s257, %s258
      %p269 = scmp.eq.s32.totalorder %s29, 0
      %p270 = por %p268, %p269
      %p271 = scmp.ne.s32.totalorder %s257, %s258
      %p272 = scmp.eq.s32.totalorder %s30, 3
      %p273 = por %p271, %p272
      %p275 = scmp.ne.s32.totalorder %s258, %s274
      %p276 = scmp.eq.s32.totalorder %s30, 0
      %p277 = por %p275, %p276
      %s278 = ssub.s32 %s32, %s39
      %p279 = scmp.eq.s32.totalorder %s278, 0
      %s281 = sadd.s32 %s280, 1
      %s282 = scalar_select %p279, %s280, %s281
      %p285 = pneg %p279
      %p286 = scmp.eq.s32.totalorder %s24, 3
      %p287 = por %p285, %p286
      %p288 = scmp.ne.s32.totalorder %s280, %s283
      %p289 = scmp.eq.s32.totalorder %s24, 0
      %p290 = por %p288, %p289
      %p291 = scmp.ne.s32.totalorder %s280, %s283
      %p292 = scmp.eq.s32.totalorder %s29, 3
      %p293 = por %p291, %p292
      %p294 = scmp.ne.s32.totalorder %s283, %s284
      %p295 = scmp.eq.s32.totalorder %s29, 0
      %p296 = por %p294, %p295
      %p297 = scmp.ne.s32.totalorder %s283, %s284
      %p298 = scmp.eq.s32.totalorder %s30, 3
      %p299 = por %p297, %p298
      %p301 = scmp.ne.s32.totalorder %s284, %s300
      %p302 = scmp.eq.s32.totalorder %s30, 0
      %p303 = por %p301, %p302
      %s304 = ssub.s32 %s32, %s39
      %p305 = scmp.eq.s32.totalorder %s304, 0
      %s307 = sadd.s32 %s306, 1
      %s308 = scalar_select %p305, %s306, %s307
      %p311 = pneg %p305
      %p312 = scmp.eq.s32.totalorder %s24, 3
      %p313 = por %p311, %p312
      %p314 = scmp.ne.s32.totalorder %s306, %s309
      %p315 = scmp.eq.s32.totalorder %s24, 0
      %p316 = por %p314, %p315
      %p317 = scmp.ne.s32.totalorder %s306, %s309
      %p318 = scmp.eq.s32.totalorder %s29, 3
      %p319 = por %p317, %p318
      %p320 = scmp.ne.s32.totalorder %s309, %s310
      %p321 = scmp.eq.s32.totalorder %s29, 0
      %p322 = por %p320, %p321
      %p323 = scmp.ne.s32.totalorder %s309, %s310
      %p324 = scmp.eq.s32.totalorder %s30, 3
      %p325 = por %p323, %p324
      %p327 = scmp.ne.s32.totalorder %s310, %s326
      %p328 = scmp.eq.s32.totalorder %s30, 0
      %p329 = por %p327, %p328
      %s330 = ssub.s32 %s32, %s39
      %p331 = scmp.eq.s32.totalorder %s330, 0
      %s333 = sadd.s32 %s332, 1
      %s334 = scalar_select %p331, %s332, %s333
      %p337 = pneg %p331
      %p338 = scmp.eq.s32.totalorder %s24, 3
      %p339 = por %p337, %p338
      %p340 = scmp.ne.s32.totalorder %s332, %s335
      %p341 = scmp.eq.s32.totalorder %s24, 0
      %p342 = por %p340, %p341
      %p343 = scmp.ne.s32.totalorder %s332, %s335
      %p344 = scmp.eq.s32.totalorder %s29, 3
      %p345 = por %p343, %p344
      %p346 = scmp.ne.s32.totalorder %s335, %s336
      %p347 = scmp.eq.s32.totalorder %s29, 0
      %p348 = por %p346, %p347
      %p349 = scmp.ne.s32.totalorder %s335, %s336
      %p350 = scmp.eq.s32.totalorder %s30, 3
      %p351 = por %p349, %p350
      %p353 = scmp.ne.s32.totalorder %s336, %s352
      %p354 = scmp.eq.s32.totalorder %s30, 0
      %p355 = por %p353, %p354
      %s356 = ssub.s32 %s32, %s39
      %p357 = scmp.eq.s32.totalorder %s356, 0
      %s359 = sadd.s32 %s358, 1
      %s360 = scalar_select %p357, %s358, %s359
      %p363 = pneg %p357
      %p364 = scmp.eq.s32.totalorder %s24, 3
      %p365 = por %p363, %p364
      %p366 = scmp.ne.s32.totalorder %s358, %s361
      %p367 = scmp.eq.s32.totalorder %s24, 0
      %p368 = por %p366, %p367
      %p369 = scmp.ne.s32.totalorder %s358, %s361
      %p370 = scmp.eq.s32.totalorder %s29, 3
      %p371 = por %p369, %p370
      %p372 = scmp.ne.s32.totalorder %s361, %s362
      %p373 = scmp.eq.s32.totalorder %s29, 0
      %p374 = por %p372, %p373
      %p375 = scmp.ne.s32.totalorder %s361, %s362
      %p376 = scmp.eq.s32.totalorder %s30, 3
      %p377 = por %p375, %p376
      %p379 = scmp.ne.s32.totalorder %s362, %s378
      %p380 = scmp.eq.s32.totalorder %s30, 0
      %p381 = por %p379, %p380
      %s383 = sadd.s32 %s382, 1
      %p386 = scmp.eq.s32.totalorder %s24, 3
      %p387 = scmp.ne.s32.totalorder %s382, %s384
      %p388 = scmp.eq.s32.totalorder %s24, 0
      %p389 = por %p387, %p388
      %p390 = scmp.ne.s32.totalorder %s382, %s384
      %p391 = scmp.eq.s32.totalorder %s29, 3
      %p392 = por %p390, %p391
      %p393 = scmp.ne.s32.totalorder %s384, %s385
      %p394 = scmp.eq.s32.totalorder %s29, 0
      %p395 = por %p393, %p394
      %p396 = scmp.ne.s32.totalorder %s384, %s385
      %p397 = scmp.eq.s32.totalorder %s30, 3
      %p398 = por %p396, %p397
      %p400 = scmp.ne.s32.totalorder %s385, %s399
      %p401 = scmp.eq.s32.totalorder %s30, 0
      %p402 = por %p400, %p401
      %s404 = sadd.s32 %s403, 1
      %p407 = scmp.eq.s32.totalorder %s24, 3
      %p408 = scmp.ne.s32.totalorder %s403, %s405
      %p409 = scmp.eq.s32.totalorder %s24, 0
      %p410 = por %p408, %p409
      %p411 = scmp.ne.s32.totalorder %s403, %s405
      %p412 = scmp.eq.s32.totalorder %s29, 3
      %p413 = por %p411, %p412
      %p414 = scmp.ne.s32.totalorder %s405, %s406
      %p415 = scmp.eq.s32.totalorder %s29, 0
      %p416 = por %p414, %p415
      %p417 = scmp.ne.s32.totalorder %s405, %s406
      %p418 = scmp.eq.s32.totalorder %s30, 3
      %p419 = por %p417, %p418
      %p421 = scmp.ne.s32.totalorder %s406, %s420
      %p422 = scmp.eq.s32.totalorder %s30, 0
      %p423 = por %p421, %p422
      %s424 = ssub.s32 %s31, %s43
      %p425 = scmp.eq.s32.totalorder %s424, 0
      %s427 = sadd.s32 %s426, 1
      %s428 = scalar_select %p425, %s426, %s427
      %p431 = pneg %p425
      %p432 = scmp.eq.s32.totalorder %s24, 3
      %p433 = por %p431, %p432
      %p434 = scmp.ne.s32.totalorder %s426, %s429
      %p435 = scmp.eq.s32.totalorder %s24, 0
      %p436 = por %p434, %p435
      %p437 = scmp.ne.s32.totalorder %s426, %s429
      %p438 = scmp.eq.s32.totalorder %s29, 3
      %p439 = por %p437, %p438
      %p440 = scmp.ne.s32.totalorder %s429, %s430
      %p441 = scmp.eq.s32.totalorder %s29, 0
      %p442 = por %p440, %p441
      %p443 = scmp.ne.s32.totalorder %s429, %s430
      %p444 = scmp.eq.s32.totalorder %s30, 3
      %p445 = por %p443, %p444
      %p447 = scmp.ne.s32.totalorder %s430, %s446
      %p448 = scmp.eq.s32.totalorder %s30, 0
      %p449 = por %p447, %p448
      %p450 = scmp.le.s32.totalorder 1, %s24
      %p451 = scmp.lt.s32.totalorder %s24, 5
      %p452 = pnand %p450, %p451
      %p453 = pneg %p452
      // Predicated region
      $region9: #{tpu_custom_call.1} parent=5 // pred_check
        _
      $region10: #{tpu_custom_call.1} parent=5 // pred_check_branch
        %455 = sbr.rel (%p452) target = $region12
      $region11: #{tpu_custom_call.1} parent=5 // pred_region
        %s456 = ssub.s32 %s24, 1
        // Predicated region
        $region13: #{tpu_custom_call.1} parent=11 // pred_check
          %p457 = pneg %p395
        $region14: #{tpu_custom_call.1} parent=11 // pred_check_branch
          %459 = sbr.rel (%p457) target = $region16
        $region15: #{tpu_custom_call.1} parent=11 // pred_region
          _
        $region16: #{tpu_custom_call.1} parent=11 // pred_fallthru
          _
        // Predicated region
        $region17: #{tpu_custom_call.1} parent=11 // pred_check
          %p460 = pneg %p416
        $region18: #{tpu_custom_call.1} parent=11 // pred_check_branch
          %462 = sbr.rel (%p460) target = $region20
        $region19: #{tpu_custom_call.1} parent=11 // pred_region
          _
        $region20: #{tpu_custom_call.1} parent=11 // pred_fallthru
          _
      $region12: #{tpu_custom_call.1} parent=5 // pred_fallthru
        _
      %p463 = scmp.lt.s32.totalorder %s24, 4
      // Predicated region
      $region21: #{tpu_custom_call.1} parent=5 // pred_check
        %p464 = pneg %p463
      $region22: #{tpu_custom_call.1} parent=5 // pred_check_branch
        %466 = sbr.rel (%p464) target = $region24
      $region23: #{tpu_custom_call.1} parent=5 // pred_region
        // Predicated region
        $region25: #{tpu_custom_call.1} parent=23 // pred_check
          %p467 = pneg %p56
        $region26: #{tpu_custom_call.1} parent=23 // pred_check_branch
          %469 = sbr.rel (%p467) target = $region28
        $region27: #{tpu_custom_call.1} parent=23 // pred_region
          %p470 = scmp.lt.s32.totalorder %s31, 1
          %s471 = scalar_select %p470, %s31, 1
          %s472 = smul.addr %s471, 8
          %s473 = scalar_lea.vmem %s0, %s472
        $region28: #{tpu_custom_call.1} parent=23 // pred_fallthru
          _
        // Predicated region
        $region29: #{tpu_custom_call.1} parent=23 // pred_check
          %p474 = pneg %p82
        $region30: #{tpu_custom_call.1} parent=23 // pred_check_branch
          %476 = sbr.rel (%p474) target = $region32
        $region31: #{tpu_custom_call.1} parent=23 // pred_region
          %p477 = scmp.lt.s32.totalorder %s32, 1
          %s478 = scalar_select %p477, %s32, 1
          %s479 = smul.addr %s478, 4
          %s480 = smul.addr %s479, 4
          %s481 = scalar_lea.vmem %s1, %s480
        $region32: #{tpu_custom_call.1} parent=23 // pred_fallthru
          _
        // Predicated region
        $region33: #{tpu_custom_call.1} parent=23 // pred_check
          %p482 = pneg %p108
        $region34: #{tpu_custom_call.1} parent=23 // pred_check_branch
          %484 = sbr.rel (%p482) target = $region36
        $region35: #{tpu_custom_call.1} parent=23 // pred_region
          %p485 = scmp.lt.s32.totalorder %s32, 1
          %s486 = scalar_select %p485, %s32, 1
          %s487 = scalar_lea.vmem %s2, %s486
        $region36: #{tpu_custom_call.1} parent=23 // pred_fallthru
          _
        // Predicated region
        $region37: #{tpu_custom_call.1} parent=23 // pred_check
          %p488 = pneg %p134
        $region38: #{tpu_custom_call.1} parent=23 // pred_check_branch
          %490 = sbr.rel (%p488) target = $region40
        $region39: #{tpu_custom_call.1} parent=23 // pred_region
          %p491 = scmp.lt.s32.totalorder %s32, 1
          %s492 = scalar_select %p491, %s32, 1
          %s493 = smul.addr %s492, 4
          %s494 = smul.addr %s493, 4
          %s495 = scalar_lea.vmem %s3, %s494
        $region40: #{tpu_custom_call.1} parent=23 // pred_fallthru
          _
        // Predicated region
        $region41: #{tpu_custom_call.1} parent=23 // pred_check
          %p496 = pneg %p160
        $region42: #{tpu_custom_call.1} parent=23 // pred_check_branch
          %498 = sbr.rel (%p496) target = $region44
        $region43: #{tpu_custom_call.1} parent=23 // pred_region
          %p499 = scmp.lt.s32.totalorder %s32, 1
          %s500 = scalar_select %p499, %s32, 1
          %s501 = scalar_lea.vmem %s4, %s500
        $region44: #{tpu_custom_call.1} parent=23 // pred_fallthru
          _
        // Predicated region
        $region45: #{tpu_custom_call.1} parent=23 // pred_check
          %p502 = pneg %p186
        $region46: #{tpu_custom_call.1} parent=23 // pred_check_branch
          %504 = sbr.rel (%p502) target = $region48
        $region47: #{tpu_custom_call.1} parent=23 // pred_region
          %p505 = scmp.lt.s32.totalorder %s32, 1
          %s506 = scalar_select %p505, %s32, 1
          %s507 = scalar_lea.vmem %s5, %s506
        $region48: #{tpu_custom_call.1} parent=23 // pred_fallthru
          _
        // Predicated region
        $region49: #{tpu_custom_call.1} parent=23 // pred_check
          %p508 = pneg %p212
        $region50: #{tpu_custom_call.1} parent=23 // pred_check_branch
          %510 = sbr.rel (%p508) target = $region52
        $region51: #{tpu_custom_call.1} parent=23 // pred_region
          %p511 = scmp.lt.s32.totalorder %s32, 1
          %s512 = scalar_select %p511, %s32, 1
          %s513 = scalar_lea.vmem %s6, %s512
        $region52: #{tpu_custom_call.1} parent=23 // pred_fallthru
          _
        // Predicated region
        $region53: #{tpu_custom_call.1} parent=23 // pred_check
          %p514 = pneg %p238
        $region54: #{tpu_custom_call.1} parent=23 // pred_check_branch
          %516 = sbr.rel (%p514) target = $region56
        $region55: #{tpu_custom_call.1} parent=23 // pred_region
          %p517 = scmp.lt.s32.totalorder %s32, 1
          %s518 = scalar_select %p517, %s32, 1
          %s519 = smul.addr %s518, 4
          %s520 = smul.addr %s519, 4
          %s521 = scalar_lea.vmem %s7, %s520
        $region56: #{tpu_custom_call.1} parent=23 // pred_fallthru
          _
        // Predicated region
        $region57: #{tpu_custom_call.1} parent=23 // pred_check
          %p522 = pneg %p264
        $region58: #{tpu_custom_call.1} parent=23 // pred_check_branch
          %524 = sbr.rel (%p522) target = $region60
        $region59: #{tpu_custom_call.1} parent=23 // pred_region
          %p525 = scmp.lt.s32.totalorder %s32, 1
          %s526 = scalar_select %p525, %s32, 1
          %s527 = scalar_lea.vmem %s8, %s526
        $region60: #{tpu_custom_call.1} parent=23 // pred_fallthru
          _
        // Predicated region
        $region61: #{tpu_custom_call.1} parent=23 // pred_check
          %p528 = pneg %p290
        $region62: #{tpu_custom_call.1} parent=23 // pred_check_branch
          %530 = sbr.rel (%p528) target = $region64
        $region63: #{tpu_custom_call.1} parent=23 // pred_region
          %p531 = scmp.lt.s32.totalorder %s32, 1
          %s532 = scalar_select %p531, %s32, 1
          %s533 = smul.addr %s532, 16
          %s534 = smul.addr %s533, 4
          %s535 = scalar_lea.vmem %s9, %s534
        $region64: #{tpu_custom_call.1} parent=23 // pred_fallthru
          _
        // Predicated region
        $region65: #{tpu_custom_call.1} parent=23 // pred_check
          %p536 = pneg %p316
        $region66: #{tpu_custom_call.1} parent=23 // pred_check_branch
          %538 = sbr.rel (%p536) target = $region68
        $region67: #{tpu_custom_call.1} parent=23 // pred_region
          %p539 = scmp.lt.s32.totalorder %s32, 1
          %s540 = scalar_select %p539, %s32, 1
          %s541 = scalar_lea.vmem %s10, %s540
        $region68: #{tpu_custom_call.1} parent=23 // pred_fallthru
          _
        // Predicated region
        $region69: #{tpu_custom_call.1} parent=23 // pred_check
          %p542 = pneg %p342
        $region70: #{tpu_custom_call.1} parent=23 // pred_check_branch
          %544 = sbr.rel (%p542) target = $region72
        $region71: #{tpu_custom_call.1} parent=23 // pred_region
          %p545 = scmp.lt.s32.totalorder %s32, 1
          %s546 = scalar_select %p545, %s32, 1
          %s547 = scalar_lea.vmem %s11, %s546
        $region72: #{tpu_custom_call.1} parent=23 // pred_fallthru
          _
        // Predicated region
        $region73: #{tpu_custom_call.1} parent=23 // pred_check
          %p548 = pneg %p368
        $region74: #{tpu_custom_call.1} parent=23 // pred_check_branch
          %550 = sbr.rel (%p548) target = $region76
        $region75: #{tpu_custom_call.1} parent=23 // pred_region
          %p551 = scmp.lt.s32.totalorder %s32, 1
          %s552 = scalar_select %p551, %s32, 1
          %s553 = scalar_lea.vmem %s12, %s552
        $region76: #{tpu_custom_call.1} parent=23 // pred_fallthru
          _
      $region24: #{tpu_custom_call.1} parent=5 // pred_fallthru
        _
      %p554 = scmp.le.s32.totalorder 1, %s24
      %p555 = scmp.lt.s32.totalorder %s24, 5
      %p556 = pnand %p554, %p555
      %p557 = pneg %p556
      // Predicated region
      $region77: #{tpu_custom_call.1} parent=5 // pred_check
        _
      $region78: #{tpu_custom_call.1} parent=5 // pred_check_branch
        %559 = sbr.rel (%p556) target = $region80
      $region79: #{tpu_custom_call.1} parent=5 // pred_region
        %s560 = ssub.s32 %s24, 1
        %p561 = scmp.lt.s32.totalorder %s33, 1
        %s562 = scalar_select %p561, %s33, 1
        %s563 = smul.addr %s562, 8
        %s564 = scalar_lea.vmem %s0, %s563
        %p565 = pneg %p62
        %p566 = pneg %p59
        %p567 = scmp.lt.s32.totalorder %s34, 1
        %s568 = scalar_select %p567, %s34, 1
        %s569 = smul.addr %s568, 4
        %s570 = smul.addr %s569, 4
        %s571 = scalar_lea.vmem %s1, %s570
        %p572 = pneg %p88
        %p573 = pneg %p85
        %p574 = scmp.lt.s32.totalorder %s34, 1
        %s575 = scalar_select %p574, %s34, 1
        %s576 = scalar_lea.vmem %s2, %s575
        %p577 = pneg %p114
        %p578 = pneg %p111
        %p579 = scmp.lt.s32.totalorder %s34, 1
        %s580 = scalar_select %p579, %s34, 1
        %s581 = smul.addr %s580, 4
        %s582 = smul.addr %s581, 4
        %s583 = scalar_lea.vmem %s3, %s582
        %p584 = pneg %p140
        %p585 = pneg %p137
        %p586 = scmp.lt.s32.totalorder %s34, 1
        %s587 = scalar_select %p586, %s34, 1
        %s588 = scalar_lea.vmem %s4, %s587
        %p589 = pneg %p166
        %p590 = pneg %p163
        %p591 = scmp.lt.s32.totalorder %s34, 1
        %s592 = scalar_select %p591, %s34, 1
        %s593 = scalar_lea.vmem %s5, %s592
        %p594 = pneg %p192
        %p595 = pneg %p189
        %p596 = scmp.lt.s32.totalorder %s34, 1
        %s597 = scalar_select %p596, %s34, 1
        %s598 = scalar_lea.vmem %s6, %s597
        %p599 = pneg %p218
        %p600 = pneg %p215
        %p601 = scmp.lt.s32.totalorder %s34, 1
        %s602 = scalar_select %p601, %s34, 1
        %s603 = smul.addr %s602, 4
        %s604 = smul.addr %s603, 4
        %s605 = scalar_lea.vmem %s7, %s604
        %p606 = pneg %p244
        %p607 = pneg %p241
        %p608 = scmp.lt.s32.totalorder %s34, 1
        %s609 = scalar_select %p608, %s34, 1
        %s610 = scalar_lea.vmem %s8, %s609
        %p611 = pneg %p270
        %p612 = pneg %p267
        %p613 = scmp.lt.s32.totalorder %s34, 1
        %s614 = scalar_select %p613, %s34, 1
        %s615 = smul.addr %s614, 16
        %s616 = smul.addr %s615, 4
        %s617 = scalar_lea.vmem %s9, %s616
        %p618 = pneg %p296
        %p619 = pneg %p293
        %p620 = scmp.lt.s32.totalorder %s34, 1
        %s621 = scalar_select %p620, %s34, 1
        %s622 = scalar_lea.vmem %s10, %s621
        %p623 = pneg %p322
        %p624 = pneg %p319
        %p625 = scmp.lt.s32.totalorder %s34, 1
        %s626 = scalar_select %p625, %s34, 1
        %s627 = scalar_lea.vmem %s11, %s626
        %p628 = pneg %p348
        %p629 = pneg %p345
        %p630 = scmp.lt.s32.totalorder %s34, 1
        %s631 = scalar_select %p630, %s34, 1
        %s632 = scalar_lea.vmem %s12, %s631
        %p633 = pneg %p374
        %p634 = pneg %p371
        %p635 = pneg %p395
        %p636 = pneg %p392
        %p637 = pneg %p416
        %p638 = pneg %p413
        %p639 = pneg %p442
        %p640 = pneg %p439
        %s641 = sand.u32 %s429, 1
        %s642 = scalar_lea.sflag [#allocation4], %s641
        %s643 = sand.u32 %s429, 1
        %s644 = smul.addr %s643, 8
        %s645 = scalar_lea.vmem [#allocation3], %s644
        %p646 = scmp.lt.s32.totalorder %s33, 1
        %s647 = scalar_select %p646, %s33, 1
        %s648 = smul.addr %s647, 8
        %s649 = scalar_lea.vmem %s0, %s648
        %p650 = scmp.lt.s32.totalorder %s34, 1
        %s651 = scalar_select %p650, %s34, 1
        %s652 = smul.addr %s651, 4
        %s653 = smul.addr %s652, 4
        %s654 = scalar_lea.vmem %s1, %s653
        %p655 = scmp.lt.s32.totalorder %s34, 1
        %s656 = scalar_select %p655, %s34, 1
        %s657 = scalar_lea.vmem %s2, %s656
        %p658 = scmp.lt.s32.totalorder %s34, 1
        %s659 = scalar_select %p658, %s34, 1
        %s660 = smul.addr %s659, 4
        %s661 = smul.addr %s660, 4
        %s662 = scalar_lea.vmem %s3, %s661
        %p663 = scmp.lt.s32.totalorder %s34, 1
        %s664 = scalar_select %p663, %s34, 1
        %s665 = scalar_lea.vmem %s4, %s664
        %p666 = scmp.lt.s32.totalorder %s34, 1
        %s667 = scalar_select %p666, %s34, 1
        %s668 = scalar_lea.vmem %s5, %s667
        %p669 = scmp.lt.s32.totalorder %s34, 1
        %s670 = scalar_select %p669, %s34, 1
        %s671 = scalar_lea.vmem %s6, %s670
        %p672 = scmp.lt.s32.totalorder %s34, 1
        %s673 = scalar_select %p672, %s34, 1
        %s674 = smul.addr %s673, 4
        %s675 = smul.addr %s674, 4
        %s676 = scalar_lea.vmem %s7, %s675
        %p677 = scmp.lt.s32.totalorder %s34, 1
        %s678 = scalar_select %p677, %s34, 1
        %s679 = scalar_lea.vmem %s8, %s678
        %p680 = scmp.lt.s32.totalorder %s34, 1
        %s681 = scalar_select %p680, %s34, 1
        %s682 = smul.addr %s681, 16
        %s683 = smul.addr %s682, 4
        %s684 = scalar_lea.vmem %s9, %s683
        %p685 = scmp.lt.s32.totalorder %s34, 1
        %s686 = scalar_select %p685, %s34, 1
        %s687 = scalar_lea.vmem %s10, %s686
        %p688 = scmp.lt.s32.totalorder %s34, 1
        %s689 = scalar_select %p688, %s34, 1
        %s690 = scalar_lea.vmem %s11, %s689
        %p691 = scmp.lt.s32.totalorder %s34, 1
        %s692 = scalar_select %p691, %s34, 1
        %s693 = scalar_lea.vmem %s12, %s692
        %p695 = scmp.eq.s32.totalorder %s34, 0
        // Predicated region
        $region81: #{tpu_custom_call.1} parent=79 // pred_check
          %p696 = pneg %p695
        $region82: #{tpu_custom_call.1} parent=79 // pred_check_branch
          %698 = sbr.rel (%p696) target = $region84
        $region83: #{tpu_custom_call.1} parent=79 // pred_region
          %v699 = vld [vmem:[%s649] sm:$0xff]
          %vm700 = vcmask 261120
          %701 = vst.msk [vmem:[#allocation2] sm:$0xff] %vm700, %v699
        $region84: #{tpu_custom_call.1} parent=79 // pred_fallthru
          _
        %v702 = vld [vmem:[#allocation2] sm:$0xff]
        %v703 = vpack.c.bf16 %v702, %v702
        %v704 = vld [vmem:[%s654] sm:$0xf]
        %v705 = vld [vmem:[%s654 + $0x4] sm:$0xf]
        %v706 = vld [vmem:[%s654 + $0x8] sm:$0xf]
        %v707 = vld [vmem:[%s654 + $0xc] sm:$0xf]
        %v708 = vld [vmem:[%s657] sm:$0x1]
        %v710 = vlaneseq
        %v711 = vshrl.u32 %v710, 7
        %v712 = vsub.s32 0, %v711
        %v713 = vrot.slane %v708, %v712
        %v719 = vunpack.c.l.b16 %v704
        %v720 = vunpack.c.l.b16 %v705
        %v721 = vunpack.c.l.b16 %v706
        %v722 = vunpack.c.l.b16 %v707
        %v723 = vpack.c.b16 %v720, %v719
        %v724 = vpack.c.b16 %v722, %v721
        %vm727 = vcmask 261120
        %v729 = vsel %vm727, %v703, 0
        %731 = vmatprep.subr.bf16.mxu0 0
        %732 = vmatpush1.bf16.msra.mxu0 0
        %733 = vmatprep.subr.bf16.mxu0 0
        %734 = vmatpush1.bf16.msra.mxu0 0
        %735 = vmatprep.subr.bf16.mxu0 0
        %736 = vmatpush1.bf16.msra.mxu0 0
        %737 = vmatprep.subr.bf16.mxu0 0
        %738 = vmatpush1.bf16.msra.mxu0 0
        %739 = vmatprep.subr.bf16.mxu0 0
        %740 = vmatpush1.bf16.msra.mxu0 0
        %741 = vmatprep.subr.bf16.mxu0 0
        %742 = vmatpush1.bf16.msra.mxu0 0
        %743 = vmatprep.subr.bf16.mxu0 0
        %744 = vmatpush1.bf16.msra.mxu0 %v724
        %745 = vmatprep.subr.bf16.mxu0 0
        %746 = vmatpush1.bf16.msra.mxu0 %v723
        %747 = vmatprep.subr.bf16.mxu0 0
        %748 = vmatpush2.bf16.msra.mxu0 0
        %749 = vmatprep.subr.bf16.mxu0 0
        %750 = vmatpush2.bf16.msra.mxu0 0
        %751 = vmatprep.subr.bf16.mxu0 0
        %752 = vmatpush2.bf16.msra.mxu0 0
        %753 = vmatprep.subr.bf16.mxu0 0
        %754 = vmatpush2.bf16.msra.mxu0 0
        %755 = vmatprep.subr.bf16.mxu0 0
        %756 = vmatpush2.bf16.msra.mxu0 0
        %757 = vmatprep.subr.bf16.mxu0 0
        %758 = vmatpush2.bf16.msra.mxu0 0
        %759 = vmatprep.subr.bf16.mxu0 0
        %760 = vmatpush2.bf16.msra.mxu0 0
        %761 = vmatprep.subr.bf16.mxu0 0
        %762 = vmatpush2.bf16.msra.mxu0 0
        %763 = vmatprep.mubr.bf16.mxu0 0
        %764 = vmatmul.mubr.bf16.gmra.mxu0 %v729
        %v765 = vpop.f32.mrf.mxu0
        %v766 = vadd.f32 %v713, %v765
        %v767 = vpop.f32.mrf.mxu0
        %v768 = vpop.f32.mrf.mxu0
        %v769 = vpop.f32.mrf.mxu0
        %770 = vdwg.mxu0
        %772 = vrot.lane.b32.xlu0 %v766, 120
        %v773 = vpop.permute.xlu0 %772
        %775 = vrot.lane.b32.xlu0 %v766, 112
        %v776 = vpop.permute.xlu0 %775
        %778 = vrot.lane.b32.xlu0 %v766, 104
        %v779 = vpop.permute.xlu0 %778
        %v781 = vpack.c.bf16 %v766, %v766
        %v782 = vpack.c.bf16 %v773, %v773
        %v783 = vpack.c.bf16 %v776, %v776
        %v784 = vpack.c.bf16 %v779, %v779
        %786 = vrot.lane.b32.xlu0 %v781, 96
        %v787 = vpop.permute.xlu0 %786
        %vm788 = vcmask 64512
        %v790 = vsel %vm788, %v781, 0
        %v793 = vsel %vm788, %v787, 0
        %795 = vmatprep.subr.bf16.mxu0 0
        %796 = vmatpush1.bf16.xpose.msra.mxu0 0
        %797 = vmatprep.subr.bf16.mxu0 0
        %798 = vmatpush1.bf16.xpose.msra.mxu0 0
        %799 = vmatprep.subr.bf16.mxu0 0
        %800 = vmatpush1.bf16.xpose.msra.mxu0 0
        %801 = vmatprep.subr.bf16.mxu0 0
        %802 = vmatpush1.bf16.xpose.msra.mxu0 0
        %803 = vmatprep.subr.bf16.mxu0 0
        %804 = vmatpush1.bf16.xpose.msra.mxu0 0
        %805 = vmatprep.subr.bf16.mxu0 0
        %806 = vmatpush1.bf16.xpose.msra.mxu0 0
        %807 = vmatprep.subr.bf16.mxu0 0
        %808 = vmatpush1.bf16.xpose.msra.mxu0 0
        %809 = vmatprep.subr.bf16.mxu0 0
        %810 = vmatpush1.bf16.xpose.msra.mxu0 %v793
        %811 = vmatprep.subr.bf16.mxu0 0
        %812 = vmatpush2.bf16.xpose.msra.mxu0 0
        %813 = vmatprep.subr.bf16.mxu0 0
        %814 = vmatpush2.bf16.xpose.msra.mxu0 0
        %815 = vmatprep.subr.bf16.mxu0 0
        %816 = vmatpush2.bf16.xpose.msra.mxu0 0
        %817 = vmatprep.subr.bf16.mxu0 0
        %818 = vmatpush2.bf16.xpose.msra.mxu0 0
        %819 = vmatprep.subr.bf16.mxu0 0
        %820 = vmatpush2.bf16.xpose.msra.mxu0 0
        %821 = vmatprep.subr.bf16.mxu0 0
        %822 = vmatpush2.bf16.xpose.msra.mxu0 0
        %823 = vmatprep.subr.bf16.mxu0 0
        %824 = vmatpush2.bf16.xpose.msra.mxu0 0
        %825 = vmatprep.subr.bf16.mxu0 0
        %826 = vmatpush2.bf16.xpose.msra.mxu0 0
        %827 = vmatprep.mubr.bf16.mxu0 0
        %828 = vmatmul.mubr.bf16.gmra.mxu0 %v790
        %v829 = vpop.f32.mrf.mxu0
        %v830 = vadd.f32 0.0, %v829
        %v831 = vpop.f32.mrf.mxu0
        %v832 = vpop.f32.mrf.mxu0
        %v833 = vpop.f32.mrf.mxu0
        %834 = vdwg.mxu0
        %836 = vrot.lane.b32.xlu0 %v782, 96
        %v837 = vpop.permute.xlu0 %836
        %v839 = vsel %vm788, %v782, 0
        %v842 = vsel %vm788, %v837, 0
        %844 = vmatprep.subr.bf16.mxu0 0
        %845 = vmatpush1.bf16.xpose.msra.mxu0 0
        %846 = vmatprep.subr.bf16.mxu0 0
        %847 = vmatpush1.bf16.xpose.msra.mxu0 0
        %848 = vmatprep.subr.bf16.mxu0 0
        %849 = vmatpush1.bf16.xpose.msra.mxu0 0
        %850 = vmatprep.subr.bf16.mxu0 0
        %851 = vmatpush1.bf16.xpose.msra.mxu0 0
        %852 = vmatprep.subr.bf16.mxu0 0
        %853 = vmatpush1.bf16.xpose.msra.mxu0 0
        %854 = vmatprep.subr.bf16.mxu0 0
        %855 = vmatpush1.bf16.xpose.msra.mxu0 0
        %856 = vmatprep.subr.bf16.mxu0 0
        %857 = vmatpush1.bf16.xpose.msra.mxu0 0
        %858 = vmatprep.subr.bf16.mxu0 0
        %859 = vmatpush1.bf16.xpose.msra.mxu0 %v842
        %860 = vmatprep.subr.bf16.mxu0 0
        %861 = vmatpush2.bf16.xpose.msra.mxu0 0
        %862 = vmatprep.subr.bf16.mxu0 0
        %863 = vmatpush2.bf16.xpose.msra.mxu0 0
        %864 = vmatprep.subr.bf16.mxu0 0
        %865 = vmatpush2.bf16.xpose.msra.mxu0 0
        %866 = vmatprep.subr.bf16.mxu0 0
        %867 = vmatpush2.bf16.xpose.msra.mxu0 0
        %868 = vmatprep.subr.bf16.mxu0 0
        %869 = vmatpush2.bf16.xpose.msra.mxu0 0
        %870 = vmatprep.subr.bf16.mxu0 0
        %871 = vmatpush2.bf16.xpose.msra.mxu0 0
        %872 = vmatprep.subr.bf16.mxu0 0
        %873 = vmatpush2.bf16.xpose.msra.mxu0 0
        %874 = vmatprep.subr.bf16.mxu0 0
        %875 = vmatpush2.bf16.xpose.msra.mxu0 0
        %876 = vmatprep.mubr.bf16.mxu0 0
        %877 = vmatmul.mubr.bf16.gmra.mxu0 %v839
        %v878 = vpop.f32.mrf.mxu0
        %v879 = vadd.f32 0.0, %v878
        %v880 = vpop.f32.mrf.mxu0
        %v881 = vpop.f32.mrf.mxu0
        %v882 = vpop.f32.mrf.mxu0
        %883 = vdwg.mxu0
        %885 = vrot.lane.b32.xlu0 %v783, 96
        %v886 = vpop.permute.xlu0 %885
        %v888 = vsel %vm788, %v783, 0
        %v891 = vsel %vm788, %v886, 0
        %893 = vmatprep.subr.bf16.mxu0 0
        %894 = vmatpush1.bf16.xpose.msra.mxu0 0
        %895 = vmatprep.subr.bf16.mxu0 0
        %896 = vmatpush1.bf16.xpose.msra.mxu0 0
        %897 = vmatprep.subr.bf16.mxu0 0
        %898 = vmatpush1.bf16.xpose.msra.mxu0 0
        %899 = vmatprep.subr.bf16.mxu0 0
        %900 = vmatpush1.bf16.xpose.msra.mxu0 0
        %901 = vmatprep.subr.bf16.mxu0 0
        %902 = vmatpush1.bf16.xpose.msra.mxu0 0
        %903 = vmatprep.subr.bf16.mxu0 0
        %904 = vmatpush1.bf16.xpose.msra.mxu0 0
        %905 = vmatprep.subr.bf16.mxu0 0
        %906 = vmatpush1.bf16.xpose.msra.mxu0 0
        %907 = vmatprep.subr.bf16.mxu0 0
        %908 = vmatpush1.bf16.xpose.msra.mxu0 %v891
        %909 = vmatprep.subr.bf16.mxu0 0
        %910 = vmatpush2.bf16.xpose.msra.mxu0 0
        %911 = vmatprep.subr.bf16.mxu0 0
        %912 = vmatpush2.bf16.xpose.msra.mxu0 0
        %913 = vmatprep.subr.bf16.mxu0 0
        %914 = vmatpush2.bf16.xpose.msra.mxu0 0
        %915 = vmatprep.subr.bf16.mxu0 0
        %916 = vmatpush2.bf16.xpose.msra.mxu0 0
        %917 = vmatprep.subr.bf16.mxu0 0
        %918 = vmatpush2.bf16.xpose.msra.mxu0 0
        %919 = vmatprep.subr.bf16.mxu0 0
        %920 = vmatpush2.bf16.xpose.msra.mxu0 0
        %921 = vmatprep.subr.bf16.mxu0 0
        %922 = vmatpush2.bf16.xpose.msra.mxu0 0
        %923 = vmatprep.subr.bf16.mxu0 0
        %924 = vmatpush2.bf16.xpose.msra.mxu0 0
        %925 = vmatprep.mubr.bf16.mxu0 0
        %926 = vmatmul.mubr.bf16.gmra.mxu0 %v888
        %v927 = vpop.f32.mrf.mxu0
        %v928 = vadd.f32 0.0, %v927
        %v929 = vpop.f32.mrf.mxu0
        %v930 = vpop.f32.mrf.mxu0
        %v931 = vpop.f32.mrf.mxu0
        %932 = vdwg.mxu0
        %934 = vrot.lane.b32.xlu0 %v784, 96
        %v935 = vpop.permute.xlu0 %934
        %v937 = vsel %vm788, %v784, 0
        %v940 = vsel %vm788, %v935, 0
        %942 = vmatprep.subr.bf16.mxu0 0
        %943 = vmatpush1.bf16.xpose.msra.mxu0 0
        %944 = vmatprep.subr.bf16.mxu0 0
        %945 = vmatpush1.bf16.xpose.msra.mxu0 0
        %946 = vmatprep.subr.bf16.mxu0 0
        %947 = vmatpush1.bf16.xpose.msra.mxu0 0
        %948 = vmatprep.subr.bf16.mxu0 0
        %949 = vmatpush1.bf16.xpose.msra.mxu0 0
        %950 = vmatprep.subr.bf16.mxu0 0
        %951 = vmatpush1.bf16.xpose.msra.mxu0 0
        %952 = vmatprep.subr.bf16.mxu0 0
        %953 = vmatpush1.bf16.xpose.msra.mxu0 0
        %954 = vmatprep.subr.bf16.mxu0 0
        %955 = vmatpush1.bf16.xpose.msra.mxu0 0
        %956 = vmatprep.subr.bf16.mxu0 0
        %957 = vmatpush1.bf16.xpose.msra.mxu0 %v940
        %958 = vmatprep.subr.bf16.mxu0 0
        %959 = vmatpush2.bf16.xpose.msra.mxu0 0
        %960 = vmatprep.subr.bf16.mxu0 0
        %961 = vmatpush2.bf16.xpose.msra.mxu0 0
        %962 = vmatprep.subr.bf16.mxu0 0
        %963 = vmatpush2.bf16.xpose.msra.mxu0 0
        %964 = vmatprep.subr.bf16.mxu0 0
        %965 = vmatpush2.bf16.xpose.msra.mxu0 0
        %966 = vmatprep.subr.bf16.mxu0 0
        %967 = vmatpush2.bf16.xpose.msra.mxu0 0
        %968 = vmatprep.subr.bf16.mxu0 0
        %969 = vmatpush2.bf16.xpose.msra.mxu0 0
        %970 = vmatprep.subr.bf16.mxu0 0
        %971 = vmatpush2.bf16.xpose.msra.mxu0 0
        %972 = vmatprep.subr.bf16.mxu0 0
        %973 = vmatpush2.bf16.xpose.msra.mxu0 0
        %974 = vmatprep.mubr.bf16.mxu0 0
        %975 = vmatmul.mubr.bf16.gmra.mxu0 %v937
        %v976 = vpop.f32.mrf.mxu0
        %v977 = vadd.f32 0.0, %v976
        %v978 = vpop.f32.mrf.mxu0
        %v979 = vpop.f32.mrf.mxu0
        %v980 = vpop.f32.mrf.mxu0
        %981 = vdwg.mxu0
        %v982 = vmul.f32 %v830, 0.35355338
        %v983 = vmul.f32 %v879, 0.35355338
        %v984 = vmul.f32 %v928, 0.35355338
        %v985 = vmul.f32 %v977, 0.35355338
        %v986 = vlaneseq
        %v987 = vshrl.u32 %v986, 7
        %v988 = vlaneseq
        %v989 = vand.u32 %v988, 127
        %vm990 = vcmp.le.s32.totalorder %v989, %v987
        %v991 = vsel %vm990, 1, 0
        %vm992 = vcmp.eq.s32.totalorder %v991, 1
        %v993 = vsel %vm992, %v982, -1e+30
        %v994 = vsel %vm992, %v983, -1e+30
        %v995 = vsel %vm992, %v984, -1e+30
        %v996 = vsel %vm992, %v985, -1e+30
        %v997 = vsel %vm788, %v993, -inf
        %998 = vmax.xlane.f32.xlu0 %v997
        %v999 = vpop.xlane.xlu0 %998
        %v1000 = vsel %vm788, %v994, -inf
        %1001 = vmax.xlane.f32.xlu0 %v1000
        %v1002 = vpop.xlane.xlu0 %1001
        %v1003 = vsel %vm788, %v995, -inf
        %1004 = vmax.xlane.f32.xlu0 %v1003
        %v1005 = vpop.xlane.xlu0 %1004
        %v1006 = vsel %vm788, %v996, -inf
        %1007 = vmax.xlane.f32.xlu0 %v1006
        %v1008 = vpop.xlane.xlu0 %1007
        %v1009 = vsub.f32 %v993, %v999
        %v1010 = vsub.f32 %v994, %v1002
        %v1011 = vsub.f32 %v995, %v1005
        %v1012 = vsub.f32 %v996, %v1008
        %v1013 = vmul.f32 %v1009, 1.442695
        %v1014 = vpow.pop %v1013
        %v1015 = vmul.f32 %v1010, 1.442695
        %v1016 = vpow.pop %v1015
        %v1017 = vmul.f32 %v1011, 1.442695
        %v1018 = vpow.pop %v1017
        %v1019 = vmul.f32 %v1012, 1.442695
        %v1020 = vpow.pop %v1019
        %v1021 = vsel %vm788, %v1014, 0.0
        %1022 = vadd.xlane.f32.xlu0 %v1021
        %v1023 = vpop.xlane.xlu0 %1022
        %v1024 = vsel %vm788, %v1016, 0.0
        %1025 = vadd.xlane.f32.xlu0 %v1024
        %v1026 = vpop.xlane.xlu0 %1025
        %v1027 = vsel %vm788, %v1018, 0.0
        %1028 = vadd.xlane.f32.xlu0 %v1027
        %v1029 = vpop.xlane.xlu0 %1028
        %v1030 = vsel %vm788, %v1020, 0.0
        %1031 = vadd.xlane.f32.xlu0 %v1030
        %v1032 = vpop.xlane.xlu0 %1031
        %v1033 = vrcp.pop %v1023
        %v1034 = vrcp.pop %v1026
        %v1035 = vrcp.pop %v1029
        %v1036 = vrcp.pop %v1032
        %v1037 = vmul.f32 %v1014, %v1033
        %v1038 = vmul.f32 %v1016, %v1034
        %v1039 = vmul.f32 %v1018, %v1035
        %v1040 = vmul.f32 %v1020, %v1036
        %v1041 = vpack.c.bf16 %v1037, %v1037
        %v1042 = vpack.c.bf16 %v1038, %v1038
        %v1043 = vpack.c.bf16 %v1039, %v1039
        %v1044 = vpack.c.bf16 %v1040, %v1040
        %1045 = vrot.lane.b32.xlu0 %v781, 64
        %v1046 = vpop.permute.xlu0 %1045
        %v1048 = vsel %vm788, %v1041, 0
        %vm1050 = vcmask 1043456
        %v1052 = vsel %vm1050, %v1046, 0
        %1054 = vmatprep.subr.bf16.mxu0 0
        %1055 = vmatpush1.bf16.msra.mxu0 0
        %1056 = vmatprep.subr.bf16.mxu0 0
        %1057 = vmatpush1.bf16.msra.mxu0 0
        %1058 = vmatprep.subr.bf16.mxu0 0
        %1059 = vmatpush1.bf16.msra.mxu0 0
        %1060 = vmatprep.subr.bf16.mxu0 0
        %1061 = vmatpush1.bf16.msra.mxu0 0
        %1062 = vmatprep.subr.bf16.mxu0 0
        %1063 = vmatpush1.bf16.msra.mxu0 0
        %1064 = vmatprep.subr.bf16.mxu0 0
        %1065 = vmatpush1.bf16.msra.mxu0 0
        %1066 = vmatprep.subr.bf16.mxu0 0
        %1067 = vmatpush1.bf16.msra.mxu0 0
        %1068 = vmatprep.subr.bf16.mxu0 0
        %1069 = vmatpush1.bf16.msra.mxu0 %v1052
        %1070 = vmatprep.subr.bf16.mxu0 0
        %1071 = vmatpush2.bf16.msra.mxu0 0
        %1072 = vmatprep.subr.bf16.mxu0 0
        %1073 = vmatpush2.bf16.msra.mxu0 0
        %1074 = vmatprep.subr.bf16.mxu0 0
        %1075 = vmatpush2.bf16.msra.mxu0 0
        %1076 = vmatprep.subr.bf16.mxu0 0
        %1077 = vmatpush2.bf16.msra.mxu0 0
        %1078 = vmatprep.subr.bf16.mxu0 0
        %1079 = vmatpush2.bf16.msra.mxu0 0
        %1080 = vmatprep.subr.bf16.mxu0 0
        %1081 = vmatpush2.bf16.msra.mxu0 0
        %1082 = vmatprep.subr.bf16.mxu0 0
        %1083 = vmatpush2.bf16.msra.mxu0 0
        %1084 = vmatprep.subr.bf16.mxu0 0
        %1085 = vmatpush2.bf16.msra.mxu0 0
        %1086 = vmatprep.mubr.bf16.mxu0 0
        %1087 = vmatmul.mubr.bf16.gmra.mxu0 %v1048
        %v1088 = vpop.f32.mrf.mxu0
        %v1089 = vadd.f32 0.0, %v1088
        %v1090 = vpop.f32.mrf.mxu0
        %v1091 = vpop.f32.mrf.mxu0
        %v1092 = vpop.f32.mrf.mxu0
        %1093 = vdwg.mxu0
        %1094 = vrot.lane.b32.xlu0 %v782, 64
        %v1095 = vpop.permute.xlu0 %1094
        %v1097 = vsel %vm788, %v1042, 0
        %v1100 = vsel %vm1050, %v1095, 0
        %1102 = vmatprep.subr.bf16.mxu0 0
        %1103 = vmatpush1.bf16.msra.mxu0 0
        %1104 = vmatprep.subr.bf16.mxu0 0
        %1105 = vmatpush1.bf16.msra.mxu0 0
        %1106 = vmatprep.subr.bf16.mxu0 0
        %1107 = vmatpush1.bf16.msra.mxu0 0
        %1108 = vmatprep.subr.bf16.mxu0 0
        %1109 = vmatpush1.bf16.msra.mxu0 0
        %1110 = vmatprep.subr.bf16.mxu0 0
        %1111 = vmatpush1.bf16.msra.mxu0 0
        %1112 = vmatprep.subr.bf16.mxu0 0
        %1113 = vmatpush1.bf16.msra.mxu0 0
        %1114 = vmatprep.subr.bf16.mxu0 0
        %1115 = vmatpush1.bf16.msra.mxu0 0
        %1116 = vmatprep.subr.bf16.mxu0 0
        %1117 = vmatpush1.bf16.msra.mxu0 %v1100
        %1118 = vmatprep.subr.bf16.mxu0 0
        %1119 = vmatpush2.bf16.msra.mxu0 0
        %1120 = vmatprep.subr.bf16.mxu0 0
        %1121 = vmatpush2.bf16.msra.mxu0 0
        %1122 = vmatprep.subr.bf16.mxu0 0
        %1123 = vmatpush2.bf16.msra.mxu0 0
        %1124 = vmatprep.subr.bf16.mxu0 0
        %1125 = vmatpush2.bf16.msra.mxu0 0
        %1126 = vmatprep.subr.bf16.mxu0 0
        %1127 = vmatpush2.bf16.msra.mxu0 0
        %1128 = vmatprep.subr.bf16.mxu0 0
        %1129 = vmatpush2.bf16.msra.mxu0 0
        %1130 = vmatprep.subr.bf16.mxu0 0
        %1131 = vmatpush2.bf16.msra.mxu0 0
        %1132 = vmatprep.subr.bf16.mxu0 0
        %1133 = vmatpush2.bf16.msra.mxu0 0
        %1134 = vmatprep.mubr.bf16.mxu0 0
        %1135 = vmatmul.mubr.bf16.gmra.mxu0 %v1097
        %v1136 = vpop.f32.mrf.mxu0
        %v1137 = vadd.f32 0.0, %v1136
        %v1138 = vpop.f32.mrf.mxu0
        %v1139 = vpop.f32.mrf.mxu0
        %v1140 = vpop.f32.mrf.mxu0
        %1141 = vdwg.mxu0
        %1142 = vrot.lane.b32.xlu0 %v783, 64
        %v1143 = vpop.permute.xlu0 %1142
        %v1145 = vsel %vm788, %v1043, 0
        %v1148 = vsel %vm1050, %v1143, 0
        %1150 = vmatprep.subr.bf16.mxu0 0
        %1151 = vmatpush1.bf16.msra.mxu0 0
        %1152 = vmatprep.subr.bf16.mxu0 0
        %1153 = vmatpush1.bf16.msra.mxu0 0
        %1154 = vmatprep.subr.bf16.mxu0 0
        %1155 = vmatpush1.bf16.msra.mxu0 0
        %1156 = vmatprep.subr.bf16.mxu0 0
        %1157 = vmatpush1.bf16.msra.mxu0 0
        %1158 = vmatprep.subr.bf16.mxu0 0
        %1159 = vmatpush1.bf16.msra.mxu0 0
        %1160 = vmatprep.subr.bf16.mxu0 0
        %1161 = vmatpush1.bf16.msra.mxu0 0
        %1162 = vmatprep.subr.bf16.mxu0 0
        %1163 = vmatpush1.bf16.msra.mxu0 0
        %1164 = vmatprep.subr.bf16.mxu0 0
        %1165 = vmatpush1.bf16.msra.mxu0 %v1148
        %1166 = vmatprep.subr.bf16.mxu0 0
        %1167 = vmatpush2.bf16.msra.mxu0 0
        %1168 = vmatprep.subr.bf16.mxu0 0
        %1169 = vmatpush2.bf16.msra.mxu0 0
        %1170 = vmatprep.subr.bf16.mxu0 0
        %1171 = vmatpush2.bf16.msra.mxu0 0
        %1172 = vmatprep.subr.bf16.mxu0 0
        %1173 = vmatpush2.bf16.msra.mxu0 0
        %1174 = vmatprep.subr.bf16.mxu0 0
        %1175 = vmatpush2.bf16.msra.mxu0 0
        %1176 = vmatprep.subr.bf16.mxu0 0
        %1177 = vmatpush2.bf16.msra.mxu0 0
        %1178 = vmatprep.subr.bf16.mxu0 0
        %1179 = vmatpush2.bf16.msra.mxu0 0
        %1180 = vmatprep.subr.bf16.mxu0 0
        %1181 = vmatpush2.bf16.msra.mxu0 0
        %1182 = vmatprep.mubr.bf16.mxu0 0
        %1183 = vmatmul.mubr.bf16.gmra.mxu0 %v1145
        %v1184 = vpop.f32.mrf.mxu0
        %v1185 = vadd.f32 0.0, %v1184
        %v1186 = vpop.f32.mrf.mxu0
        %v1187 = vpop.f32.mrf.mxu0
        %v1188 = vpop.f32.mrf.mxu0
        %1189 = vdwg.mxu0
        %1190 = vrot.lane.b32.xlu0 %v784, 64
        %v1191 = vpop.permute.xlu0 %1190
        %v1193 = vsel %vm788, %v1044, 0
        %v1196 = vsel %vm1050, %v1191, 0
        %1198 = vmatprep.subr.bf16.mxu0 0
        %1199 = vmatpush1.bf16.msra.mxu0 0
        %1200 = vmatprep.subr.bf16.mxu0 0
        %1201 = vmatpush1.bf16.msra.mxu0 0
        %1202 = vmatprep.subr.bf16.mxu0 0
        %1203 = vmatpush1.bf16.msra.mxu0 0
        %1204 = vmatprep.subr.bf16.mxu0 0
        %1205 = vmatpush1.bf16.msra.mxu0 0
        %1206 = vmatprep.subr.bf16.mxu0 0
        %1207 = vmatpush1.bf16.msra.mxu0 0
        %1208 = vmatprep.subr.bf16.mxu0 0
        %1209 = vmatpush1.bf16.msra.mxu0 0
        %1210 = vmatprep.subr.bf16.mxu0 0
        %1211 = vmatpush1.bf16.msra.mxu0 0
        %1212 = vmatprep.subr.bf16.mxu0 0
        %1213 = vmatpush1.bf16.msra.mxu0 %v1196
        %1214 = vmatprep.subr.bf16.mxu0 0
        %1215 = vmatpush2.bf16.msra.mxu0 0
        %1216 = vmatprep.subr.bf16.mxu0 0
        %1217 = vmatpush2.bf16.msra.mxu0 0
        %1218 = vmatprep.subr.bf16.mxu0 0
        %1219 = vmatpush2.bf16.msra.mxu0 0
        %1220 = vmatprep.subr.bf16.mxu0 0
        %1221 = vmatpush2.bf16.msra.mxu0 0
        %1222 = vmatprep.subr.bf16.mxu0 0
        %1223 = vmatpush2.bf16.msra.mxu0 0
        %1224 = vmatprep.subr.bf16.mxu0 0
        %1225 = vmatpush2.bf16.msra.mxu0 0
        %1226 = vmatprep.subr.bf16.mxu0 0
        %1227 = vmatpush2.bf16.msra.mxu0 0
        %1228 = vmatprep.subr.bf16.mxu0 0
        %1229 = vmatpush2.bf16.msra.mxu0 0
        %1230 = vmatprep.mubr.bf16.mxu0 0
        %1231 = vmatmul.mubr.bf16.gmra.mxu0 %v1193
        %v1232 = vpop.f32.mrf.mxu0
        %v1233 = vadd.f32 0.0, %v1232
        %v1234 = vpop.f32.mrf.mxu0
        %v1235 = vpop.f32.mrf.mxu0
        %v1236 = vpop.f32.mrf.mxu0
        %1237 = vdwg.mxu0
        %v1238 = vpack.c.bf16 %v1089, %v1089
        %v1239 = vpack.c.bf16 %v1137, %v1137
        %v1240 = vpack.c.bf16 %v1185, %v1185
        %v1241 = vpack.c.bf16 %v1233, %v1233
        %v1242 = vld [vmem:[%s662] sm:$0xf]
        %v1243 = vld [vmem:[%s662 + $0x4] sm:$0xf]
        %v1244 = vld [vmem:[%s662 + $0x8] sm:$0xf]
        %v1245 = vld [vmem:[%s662 + $0xc] sm:$0xf]
        %v1247 = vsel %vm788, %v1238, 0
        %v1250 = vsel %vm1050, %v1242, 0
        %1252 = vmatprep.subr.bf16.mxu0 0
        %1253 = vmatpush1.bf16.msra.mxu0 0
        %1254 = vmatprep.subr.bf16.mxu0 0
        %1255 = vmatpush1.bf16.msra.mxu0 0
        %1256 = vmatprep.subr.bf16.mxu0 0
        %1257 = vmatpush1.bf16.msra.mxu0 0
        %1258 = vmatprep.subr.bf16.mxu0 0
        %1259 = vmatpush1.bf16.msra.mxu0 0
        %1260 = vmatprep.subr.bf16.mxu0 0
        %1261 = vmatpush1.bf16.msra.mxu0 0
        %1262 = vmatprep.subr.bf16.mxu0 0
        %1263 = vmatpush1.bf16.msra.mxu0 0
        %1264 = vmatprep.subr.bf16.mxu0 0
        %1265 = vmatpush1.bf16.msra.mxu0 0
        %1266 = vmatprep.subr.bf16.mxu0 0
        %1267 = vmatpush1.bf16.msra.mxu0 %v1250
        %1268 = vmatprep.subr.bf16.mxu0 0
        %1269 = vmatpush2.bf16.msra.mxu0 0
        %1270 = vmatprep.subr.bf16.mxu0 0
        %1271 = vmatpush2.bf16.msra.mxu0 0
        %1272 = vmatprep.subr.bf16.mxu0 0
        %1273 = vmatpush2.bf16.msra.mxu0 0
        %1274 = vmatprep.subr.bf16.mxu0 0
        %1275 = vmatpush2.bf16.msra.mxu0 0
        %1276 = vmatprep.subr.bf16.mxu0 0
        %1277 = vmatpush2.bf16.msra.mxu0 0
        %1278 = vmatprep.subr.bf16.mxu0 0
        %1279 = vmatpush2.bf16.msra.mxu0 0
        %1280 = vmatprep.subr.bf16.mxu0 0
        %1281 = vmatpush2.bf16.msra.mxu0 0
        %1282 = vmatprep.subr.bf16.mxu0 0
        %1283 = vmatpush2.bf16.msra.mxu0 0
        %1284 = vmatprep.mubr.bf16.mxu0 0
        %1285 = vmatmul.mubr.bf16.gmra.mxu0 %v1247
        %v1286 = vpop.f32.mrf.mxu0
        %v1287 = vadd.f32 0.0, %v1286
        %v1288 = vpop.f32.mrf.mxu0
        %v1289 = vpop.f32.mrf.mxu0
        %v1290 = vpop.f32.mrf.mxu0
        %1291 = vdwg.mxu0
        %v1293 = vsel %vm788, %v1239, 0
        %v1296 = vsel %vm1050, %v1243, 0
        %1298 = vmatprep.subr.bf16.mxu0 0
        %1299 = vmatpush1.bf16.msra.mxu0 0
        %1300 = vmatprep.subr.bf16.mxu0 0
        %1301 = vmatpush1.bf16.msra.mxu0 0
        %1302 = vmatprep.subr.bf16.mxu0 0
        %1303 = vmatpush1.bf16.msra.mxu0 0
        %1304 = vmatprep.subr.bf16.mxu0 0
        %1305 = vmatpush1.bf16.msra.mxu0 0
        %1306 = vmatprep.subr.bf16.mxu0 0
        %1307 = vmatpush1.bf16.msra.mxu0 0
        %1308 = vmatprep.subr.bf16.mxu0 0
        %1309 = vmatpush1.bf16.msra.mxu0 0
        %1310 = vmatprep.subr.bf16.mxu0 0
        %1311 = vmatpush1.bf16.msra.mxu0 0
        %1312 = vmatprep.subr.bf16.mxu0 0
        %1313 = vmatpush1.bf16.msra.mxu0 %v1296
        %1314 = vmatprep.subr.bf16.mxu0 0
        %1315 = vmatpush2.bf16.msra.mxu0 0
        %1316 = vmatprep.subr.bf16.mxu0 0
        %1317 = vmatpush2.bf16.msra.mxu0 0
        %1318 = vmatprep.subr.bf16.mxu0 0
        %1319 = vmatpush2.bf16.msra.mxu0 0
        %1320 = vmatprep.subr.bf16.mxu0 0
        %1321 = vmatpush2.bf16.msra.mxu0 0
        %1322 = vmatprep.subr.bf16.mxu0 0
        %1323 = vmatpush2.bf16.msra.mxu0 0
        %1324 = vmatprep.subr.bf16.mxu0 0
        %1325 = vmatpush2.bf16.msra.mxu0 0
        %1326 = vmatprep.subr.bf16.mxu0 0
        %1327 = vmatpush2.bf16.msra.mxu0 0
        %1328 = vmatprep.subr.bf16.mxu0 0
        %1329 = vmatpush2.bf16.msra.mxu0 0
        %1330 = vmatprep.mubr.bf16.mxu0 0
        %1331 = vmatmul.mubr.bf16.gmra.mxu0 %v1293
        %v1332 = vpop.f32.mrf.mxu0
        %v1333 = vadd.f32 0.0, %v1332
        %v1334 = vpop.f32.mrf.mxu0
        %v1335 = vpop.f32.mrf.mxu0
        %v1336 = vpop.f32.mrf.mxu0
        %1337 = vdwg.mxu0
        %v1339 = vsel %vm788, %v1240, 0
        %v1342 = vsel %vm1050, %v1244, 0
        %1344 = vmatprep.subr.bf16.mxu0 0
        %1345 = vmatpush1.bf16.msra.mxu0 0
        %1346 = vmatprep.subr.bf16.mxu0 0
        %1347 = vmatpush1.bf16.msra.mxu0 0
        %1348 = vmatprep.subr.bf16.mxu0 0
        %1349 = vmatpush1.bf16.msra.mxu0 0
        %1350 = vmatprep.subr.bf16.mxu0 0
        %1351 = vmatpush1.bf16.msra.mxu0 0
        %1352 = vmatprep.subr.bf16.mxu0 0
        %1353 = vmatpush1.bf16.msra.mxu0 0
        %1354 = vmatprep.subr.bf16.mxu0 0
        %1355 = vmatpush1.bf16.msra.mxu0 0
        %1356 = vmatprep.subr.bf16.mxu0 0
        %1357 = vmatpush1.bf16.msra.mxu0 0
        %1358 = vmatprep.subr.bf16.mxu0 0
        %1359 = vmatpush1.bf16.msra.mxu0 %v1342
        %1360 = vmatprep.subr.bf16.mxu0 0
        %1361 = vmatpush2.bf16.msra.mxu0 0
        %1362 = vmatprep.subr.bf16.mxu0 0
        %1363 = vmatpush2.bf16.msra.mxu0 0
        %1364 = vmatprep.subr.bf16.mxu0 0
        %1365 = vmatpush2.bf16.msra.mxu0 0
        %1366 = vmatprep.subr.bf16.mxu0 0
        %1367 = vmatpush2.bf16.msra.mxu0 0
        %1368 = vmatprep.subr.bf16.mxu0 0
        %1369 = vmatpush2.bf16.msra.mxu0 0
        %1370 = vmatprep.subr.bf16.mxu0 0
        %1371 = vmatpush2.bf16.msra.mxu0 0
        %1372 = vmatprep.subr.bf16.mxu0 0
        %1373 = vmatpush2.bf16.msra.mxu0 0
        %1374 = vmatprep.subr.bf16.mxu0 0
        %1375 = vmatpush2.bf16.msra.mxu0 0
        %1376 = vmatprep.mubr.bf16.mxu0 0
        %1377 = vmatmul.mubr.bf16.gmra.mxu0 %v1339
        %v1378 = vpop.f32.mrf.mxu0
        %v1379 = vadd.f32 0.0, %v1378
        %v1380 = vpop.f32.mrf.mxu0
        %v1381 = vpop.f32.mrf.mxu0
        %v1382 = vpop.f32.mrf.mxu0
        %1383 = vdwg.mxu0
        %v1385 = vsel %vm788, %v1241, 0
        %v1388 = vsel %vm1050, %v1245, 0
        %1390 = vmatprep.subr.bf16.mxu0 0
        %1391 = vmatpush1.bf16.msra.mxu0 0
        %1392 = vmatprep.subr.bf16.mxu0 0
        %1393 = vmatpush1.bf16.msra.mxu0 0
        %1394 = vmatprep.subr.bf16.mxu0 0
        %1395 = vmatpush1.bf16.msra.mxu0 0
        %1396 = vmatprep.subr.bf16.mxu0 0
        %1397 = vmatpush1.bf16.msra.mxu0 0
        %1398 = vmatprep.subr.bf16.mxu0 0
        %1399 = vmatpush1.bf16.msra.mxu0 0
        %1400 = vmatprep.subr.bf16.mxu0 0
        %1401 = vmatpush1.bf16.msra.mxu0 0
        %1402 = vmatprep.subr.bf16.mxu0 0
        %1403 = vmatpush1.bf16.msra.mxu0 0
        %1404 = vmatprep.subr.bf16.mxu0 0
        %1405 = vmatpush1.bf16.msra.mxu0 %v1388
        %1406 = vmatprep.subr.bf16.mxu0 0
        %1407 = vmatpush2.bf16.msra.mxu0 0
        %1408 = vmatprep.subr.bf16.mxu0 0
        %1409 = vmatpush2.bf16.msra.mxu0 0
        %1410 = vmatprep.subr.bf16.mxu0 0
        %1411 = vmatpush2.bf16.msra.mxu0 0
        %1412 = vmatprep.subr.bf16.mxu0 0
        %1413 = vmatpush2.bf16.msra.mxu0 0
        %1414 = vmatprep.subr.bf16.mxu0 0
        %1415 = vmatpush2.bf16.msra.mxu0 0
        %1416 = vmatprep.subr.bf16.mxu0 0
        %1417 = vmatpush2.bf16.msra.mxu0 0
        %1418 = vmatprep.subr.bf16.mxu0 0
        %1419 = vmatpush2.bf16.msra.mxu0 0
        %1420 = vmatprep.subr.bf16.mxu0 0
        %1421 = vmatpush2.bf16.msra.mxu0 0
        %1422 = vmatprep.mubr.bf16.mxu0 0
        %1423 = vmatmul.mubr.bf16.gmra.mxu0 %v1385
        %v1424 = vpop.f32.mrf.mxu0
        %v1425 = vadd.f32 0.0, %v1424
        %v1426 = vpop.f32.mrf.mxu0
        %v1427 = vpop.f32.mrf.mxu0
        %v1428 = vpop.f32.mrf.mxu0
        %1429 = vdwg.mxu0
        %v1430 = vsel %vm727, %v1287, 0.0
        %v1431 = vsel %vm727, %v1333, 0.0
        %v1432 = vadd.f32 %v1430, %v1431
        %v1433 = vsel %vm727, %v1379, 0.0
        %v1434 = vadd.f32 %v1432, %v1433
        %v1435 = vsel %vm727, %v1425, 0.0
        %v1436 = vadd.f32 %v1434, %v1435
        %v1437 = vld [vmem:[%s665] sm:$0x1]
        %v1439 = vlaneseq
        %v1440 = vshrl.u32 %v1439, 7
        %v1441 = vsub.s32 0, %v1440
        %v1442 = vrot.slane %v1437, %v1441
        %v1444 = vadd.f32 %v1436, %v1442
        %v1445 = vadd.f32 %v702, %v1444
        %v1446 = vld [vmem:[%s668] sm:$0x1]
        %v1447 = vld [vmem:[%s671] sm:$0x1]
        %v1448 = vsel %vm727, %v1445, 0.0
        %1449 = vadd.xlane.f32.xlu0 %v1448
        %v1450 = vpop.xlane.xlu0 %1449
        %v1451 = vrcp.pop 32.0
        %v1452 = vmul.f32 %v1450, %v1451
        %v1453 = vsub.f32 %v1445, %v1452
        %v1454 = vmul.f32 %v1453, %v1453
        %v1455 = vsel %vm727, %v1454, 0.0
        %1456 = vadd.xlane.f32.xlu0 %v1455
        %v1457 = vpop.xlane.xlu0 %1456
        %v1458 = vmul.f32 %v1457, %v1451
        %v1459 = vadd.f32 %v1458, 1e-05
        %v1460 = vrsqrt.pop %v1459
        %v1461 = vmul.f32 %v1453, %v1460
        %v1463 = vlaneseq
        %v1464 = vshrl.u32 %v1463, 7
        %v1465 = vsub.s32 0, %v1464
        %v1466 = vrot.slane %v1446, %v1465
        %v1468 = vmul.f32 %v1461, %v1466
        %v1470 = vlaneseq
        %v1471 = vshrl.u32 %v1470, 7
        %v1472 = vsub.s32 0, %v1471
        %v1473 = vrot.slane %v1447, %v1472
        %v1475 = vadd.f32 %v1468, %v1473
        %v1476 = vpack.c.bf16 %v1475, %v1475
        %v1477 = vld [vmem:[%s676] sm:$0xf]
        %v1478 = vld [vmem:[%s676 + $0x4] sm:$0xf]
        %v1479 = vld [vmem:[%s676 + $0x8] sm:$0xf]
        %v1480 = vld [vmem:[%s676 + $0xc] sm:$0xf]
        %v1481 = vld [vmem:[%s679] sm:$0x1]
        %v1483 = vlaneseq
        %v1484 = vshrl.u32 %v1483, 7
        %v1485 = vsub.s32 0, %v1484
        %v1486 = vrot.slane %v1481, %v1485
        %v1492 = vunpack.c.l.b16 %v1477
        %v1493 = vunpack.c.l.b16 %v1478
        %v1494 = vunpack.c.l.b16 %v1479
        %v1495 = vunpack.c.l.b16 %v1480
        %v1496 = vpack.c.b16 %v1493, %v1492
        %v1497 = vpack.c.b16 %v1495, %v1494
        %v1501 = vsel %vm727, %v1476, 0
        %1503 = vmatprep.subr.bf16.mxu0 0
        %1504 = vmatpush1.bf16.msra.mxu0 0
        %1505 = vmatprep.subr.bf16.mxu0 0
        %1506 = vmatpush1.bf16.msra.mxu0 0
        %1507 = vmatprep.subr.bf16.mxu0 0
        %1508 = vmatpush1.bf16.msra.mxu0 0
        %1509 = vmatprep.subr.bf16.mxu0 0
        %1510 = vmatpush1.bf16.msra.mxu0 0
        %1511 = vmatprep.subr.bf16.mxu0 0
        %1512 = vmatpush1.bf16.msra.mxu0 0
        %1513 = vmatprep.subr.bf16.mxu0 0
        %1514 = vmatpush1.bf16.msra.mxu0 0
        %1515 = vmatprep.subr.bf16.mxu0 0
        %1516 = vmatpush1.bf16.msra.mxu0 %v1497
        %1517 = vmatprep.subr.bf16.mxu0 0
        %1518 = vmatpush1.bf16.msra.mxu0 %v1496
        %1519 = vmatprep.subr.bf16.mxu0 0
        %1520 = vmatpush2.bf16.msra.mxu0 0
        %1521 = vmatprep.subr.bf16.mxu0 0
        %1522 = vmatpush2.bf16.msra.mxu0 0
        %1523 = vmatprep.subr.bf16.mxu0 0
        %1524 = vmatpush2.bf16.msra.mxu0 0
        %1525 = vmatprep.subr.bf16.mxu0 0
        %1526 = vmatpush2.bf16.msra.mxu0 0
        %1527 = vmatprep.subr.bf16.mxu0 0
        %1528 = vmatpush2.bf16.msra.mxu0 0
        %1529 = vmatprep.subr.bf16.mxu0 0
        %1530 = vmatpush2.bf16.msra.mxu0 0
        %1531 = vmatprep.subr.bf16.mxu0 0
        %1532 = vmatpush2.bf16.msra.mxu0 0
        %1533 = vmatprep.subr.bf16.mxu0 0
        %1534 = vmatpush2.bf16.msra.mxu0 0
        %1535 = vmatprep.mubr.bf16.mxu0 0
        %1536 = vmatmul.mubr.bf16.gmra.mxu0 %v1501
        %v1537 = vpop.f32.mrf.mxu0
        %v1538 = vadd.f32 %v1486, %v1537
        %v1539 = vpop.f32.mrf.mxu0
        %v1540 = vpop.f32.mrf.mxu0
        %v1541 = vpop.f32.mrf.mxu0
        %1542 = vdwg.mxu0
        %v1543 = vmax.f32 %v1538, 0.0
        %v1544 = vpack.c.bf16 %v1543, %v1543
        %v1545 = vld [vmem:[%s684] sm:$0xf]
        %v1546 = vld [vmem:[%s684 + $0x4] sm:$0xf]
        %v1547 = vld [vmem:[%s684 + $0x8] sm:$0xf]
        %v1548 = vld [vmem:[%s684 + $0xc] sm:$0xf]
        %v1549 = vld [vmem:[%s684 + $0x10] sm:$0xf]
        %v1550 = vld [vmem:[%s684 + $0x14] sm:$0xf]
        %v1551 = vld [vmem:[%s684 + $0x18] sm:$0xf]
        %v1552 = vld [vmem:[%s684 + $0x1c] sm:$0xf]
        %v1553 = vld [vmem:[%s684 + $0x20] sm:$0xf]
        %v1554 = vld [vmem:[%s684 + $0x24] sm:$0xf]
        %v1555 = vld [vmem:[%s684 + $0x28] sm:$0xf]
        %v1556 = vld [vmem:[%s684 + $0x2c] sm:$0xf]
        %v1557 = vld [vmem:[%s684 + $0x30] sm:$0xf]
        %v1558 = vld [vmem:[%s684 + $0x34] sm:$0xf]
        %v1559 = vld [vmem:[%s684 + $0x38] sm:$0xf]
        %v1560 = vld [vmem:[%s684 + $0x3c] sm:$0xf]
        %v1561 = vld [vmem:[%s687] sm:$0x1]
        %v1563 = vlaneseq
        %v1564 = vshrl.u32 %v1563, 7
        %v1565 = vsub.s32 0, %v1564
        %v1566 = vrot.slane %v1561, %v1565
        %v1584 = vunpack.c.l.b16 %v1545
        %v1585 = vunpack.c.l.b16 %v1546
        %v1586 = vunpack.c.l.b16 %v1547
        %v1587 = vunpack.c.l.b16 %v1548
        %v1588 = vunpack.c.l.b16 %v1549
        %v1589 = vunpack.c.l.b16 %v1550
        %v1590 = vunpack.c.l.b16 %v1551
        %v1591 = vunpack.c.l.b16 %v1552
        %v1592 = vunpack.c.l.b16 %v1553
        %v1593 = vunpack.c.l.b16 %v1554
        %v1594 = vunpack.c.l.b16 %v1555
        %v1595 = vunpack.c.l.b16 %v1556
        %v1596 = vunpack.c.l.b16 %v1557
        %v1597 = vunpack.c.l.b16 %v1558
        %v1598 = vunpack.c.l.b16 %v1559
        %v1599 = vunpack.c.l.b16 %v1560
        %v1600 = vpack.c.b16 %v1585, %v1584
        %v1601 = vpack.c.b16 %v1587, %v1586
        %v1602 = vpack.c.b16 %v1589, %v1588
        %v1603 = vpack.c.b16 %v1591, %v1590
        %v1604 = vpack.c.b16 %v1593, %v1592
        %v1605 = vpack.c.b16 %v1595, %v1594
        %v1606 = vpack.c.b16 %v1597, %v1596
        %v1607 = vpack.c.b16 %v1599, %v1598
        %1616 = vmatprep.subr.bf16.mxu0 0
        %1617 = vmatpush1.bf16.msra.mxu0 %v1607
        %1618 = vmatprep.subr.bf16.mxu0 0
        %1619 = vmatpush1.bf16.msra.mxu0 %v1606
        %1620 = vmatprep.subr.bf16.mxu0 0
        %1621 = vmatpush1.bf16.msra.mxu0 %v1605
        %1622 = vmatprep.subr.bf16.mxu0 0
        %1623 = vmatpush1.bf16.msra.mxu0 %v1604
        %1624 = vmatprep.subr.bf16.mxu0 0
        %1625 = vmatpush1.bf16.msra.mxu0 %v1603
        %1626 = vmatprep.subr.bf16.mxu0 0
        %1627 = vmatpush1.bf16.msra.mxu0 %v1602
        %1628 = vmatprep.subr.bf16.mxu0 0
        %1629 = vmatpush1.bf16.msra.mxu0 %v1601
        %1630 = vmatprep.subr.bf16.mxu0 0
        %1631 = vmatpush1.bf16.msra.mxu0 %v1600
        %1632 = vmatprep.subr.bf16.mxu0 0
        %1633 = vmatpush2.bf16.msra.mxu0 0
        %1634 = vmatprep.subr.bf16.mxu0 0
        %1635 = vmatpush2.bf16.msra.mxu0 0
        %1636 = vmatprep.subr.bf16.mxu0 0
        %1637 = vmatpush2.bf16.msra.mxu0 0
        %1638 = vmatprep.subr.bf16.mxu0 0
        %1639 = vmatpush2.bf16.msra.mxu0 0
        %1640 = vmatprep.subr.bf16.mxu0 0
        %1641 = vmatpush2.bf16.msra.mxu0 0
        %1642 = vmatprep.subr.bf16.mxu0 0
        %1643 = vmatpush2.bf16.msra.mxu0 0
        %1644 = vmatprep.subr.bf16.mxu0 0
        %1645 = vmatpush2.bf16.msra.mxu0 0
        %1646 = vmatprep.subr.bf16.mxu0 0
        %1647 = vmatpush2.bf16.msra.mxu0 0
        %1648 = vmatprep.mubr.bf16.mxu0 0
        %1649 = vmatmul.mubr.bf16.gmra.mxu0 %v1544
        %v1650 = vpop.f32.mrf.mxu0
        %v1651 = vadd.f32 %v1566, %v1650
        %v1652 = vpop.f32.mrf.mxu0
        %v1653 = vpop.f32.mrf.mxu0
        %v1654 = vpop.f32.mrf.mxu0
        %1655 = vdwg.mxu0
        %v1656 = vadd.f32 %v1475, %v1651
        %v1657 = vld [vmem:[%s690] sm:$0x1]
        %v1658 = vld [vmem:[%s693] sm:$0x1]
        %v1659 = vsel %vm727, %v1656, 0.0
        %1660 = vadd.xlane.f32.xlu0 %v1659
        %v1661 = vpop.xlane.xlu0 %1660
        %v1662 = vmul.f32 %v1661, %v1451
        %v1663 = vsub.f32 %v1656, %v1662
        %v1664 = vmul.f32 %v1663, %v1663
        %v1665 = vsel %vm727, %v1664, 0.0
        %1666 = vadd.xlane.f32.xlu0 %v1665
        %v1667 = vpop.xlane.xlu0 %1666
        %v1668 = vmul.f32 %v1667, %v1451
        %v1669 = vadd.f32 %v1668, 1e-05
        %v1670 = vrsqrt.pop %v1669
        %v1671 = vmul.f32 %v1663, %v1670
        %v1673 = vlaneseq
        %v1674 = vshrl.u32 %v1673, 7
        %v1675 = vsub.s32 0, %v1674
        %v1676 = vrot.slane %v1657, %v1675
        %v1678 = vmul.f32 %v1671, %v1676
        %v1680 = vlaneseq
        %v1681 = vshrl.u32 %v1680, 7
        %v1682 = vsub.s32 0, %v1681
        %v1683 = vrot.slane %v1658, %v1682
        %v1685 = vadd.f32 %v1678, %v1683
        %1686 = vst.msk [vmem:[#allocation2] sm:$0xff] %vm727, %v1685
        %p1687 = scmp.eq.s32.totalorder %s34, 1
        // Predicated region
        $region85: #{tpu_custom_call.1} parent=79 // pred_check
          %p1688 = pneg %p1687
        $region86: #{tpu_custom_call.1} parent=79 // pred_check_branch
          %1690 = sbr.rel (%p1688) target = $region88
        $region87: #{tpu_custom_call.1} parent=79 // pred_region
          %v1691 = vld [vmem:[%s13] sm:$0x1]
          %v1692 = vld [vmem:[%s14] sm:$0x1]
          %v1693 = vsel %vm727, %v1685, 0.0
          %1694 = vadd.xlane.f32.xlu0 %v1693
          %v1695 = vpop.xlane.xlu0 %1694
          %v1696 = vmul.f32 %v1695, %v1451
          %v1697 = vsub.f32 %v1685, %v1696
          %v1698 = vmul.f32 %v1697, %v1697
          %v1699 = vsel %vm727, %v1698, 0.0
          %1700 = vadd.xlane.f32.xlu0 %v1699
          %v1701 = vpop.xlane.xlu0 %1700
          %v1702 = vmul.f32 %v1701, %v1451
          %v1703 = vadd.f32 %v1702, 1e-05
          %v1704 = vrsqrt.pop %v1703
          %v1705 = vmul.f32 %v1697, %v1704
          %v1707 = vlaneseq
          %v1708 = vshrl.u32 %v1707, 7
          %v1709 = vsub.s32 0, %v1708
          %v1710 = vrot.slane %v1691, %v1709
          %v1712 = vmul.f32 %v1705, %v1710
          %v1714 = vlaneseq
          %v1715 = vshrl.u32 %v1714, 7
          %v1716 = vsub.s32 0, %v1715
          %v1717 = vrot.slane %v1692, %v1716
          %v1719 = vadd.f32 %v1712, %v1717
          %1720 = vst.msk [vmem:[%s645] sm:$0xff] %vm727, %v1719
        $region88: #{tpu_custom_call.1} parent=79 // pred_fallthru
          _
        %s1721 = sand.u32 %s429, 1
        %s1722 = scalar_lea.sflag [#allocation4], %s1721
        %s1723 = sand.u32 %s429, 1
        %s1724 = smul.addr %s1723, 8
        %s1725 = scalar_lea.vmem [#allocation3], %s1724
        // Predicated region
        $region89: #{tpu_custom_call.1} parent=79 // pred_check
          %p1726 = pneg %p439
        $region90: #{tpu_custom_call.1} parent=79 // pred_check_branch
          %1728 = sbr.rel (%p1726) target = $region92
        $region91: #{tpu_custom_call.1} parent=79 // pred_region
          %s1730 = ssub.s32 128, 128
          %1731 = vsyncadd %s1722, %s1730
          %s1732 = smul.addr %s33, 128
          %s1733 = scalar_lea.hbm %s15, %s1732
          %s1735 = sshll.u32 %s1725, 4
          %s1736 = int_to_ptr.vmem [resolvable:$true] %s1735
          %1738 = dma.vmem_to_hbm [thread:$0]  %s1736, 128, %s1733, %s1722
        $region92: #{tpu_custom_call.1} parent=79 // pred_fallthru
          _
      $region80: #{tpu_custom_call.1} parent=5 // pred_fallthru
        _
      %p1739 = scmp.le.s32.totalorder 2, %s24
      // Predicated region
      $region93: #{tpu_custom_call.1} parent=5 // pred_check
        %p1740 = pneg %p1739
      $region94: #{tpu_custom_call.1} parent=5 // pred_check_branch
        %1742 = sbr.rel (%p1740) target = $region96
      $region95: #{tpu_custom_call.1} parent=5 // pred_region
        %s1743 = ssub.s32 %s24, 2
        // Predicated region
        $region97: #{tpu_custom_call.1} parent=95 // pred_check
          %p1744 = pneg %p445
        $region98: #{tpu_custom_call.1} parent=95 // pred_check_branch
          %1746 = sbr.rel (%p1744) target = $region100
        $region99: #{tpu_custom_call.1} parent=95 // pred_region
          %s1747 = sand.u32 %s430, 1
          %s1748 = scalar_lea.sflag [#allocation4], %s1747
          %s1749 = sand.u32 %s430, 1
          %s1750 = smul.addr %s1749, 8
          %s1751 = scalar_lea.vmem [#allocation3], %s1750
          %1752 = dma.done %s1748, 128
        $region100: #{tpu_custom_call.1} parent=95 // pred_fallthru
          _
      $region96: #{tpu_custom_call.1} parent=5 // pred_fallthru
        _
    $region6: #{tpu_custom_call.1} parent=1 // loop_footer
      %s28 = sadd.s32 1, %s24
    $region7: #{tpu_custom_call.1} parent=1 // loop_footer_branch
      %23 = sbr.rel target = $region3
    $region8: #{tpu_custom_call.1} parent=1 // loop_exit
      _
    %1753 = vsyncpa [#allocation4], 1
    %s1754 = scalar_lea.sflag [#allocation4], 1
    %1755 = vsyncpa %s1754, 1

</llo_original>
